<compile_context>
chip_gen: v5e
topology: v5e:2x2
jax: 0.10.0
libtpu: 0.0.40
codegen_flags: <defaults>
</compile_context>

<pallas_src>
import functools

import jax
import jax.numpy as jnp
from jax.experimental import pallas as pl
from jax.experimental.pallas import tpu as pltpu

_VMEM = pl.BlockSpec(memory_space=pltpu.MemorySpace.VMEM)
_BN_EPS = 1e-5
_NEG_SLOPE = 0.2     # GATConv default negative_slope
_MASK = -1e30        # additive mask for non-edges / padded classes


def _gat_fused_kernel(x_ref, adj_ref, wc_ref, brow_ref, w1_ref, b1_ref,
                      w23_ref, b23_ref, out_ref, *, num_layers, feat, cls):
    """4x (GATConv -> ReLU [BN folded into next weights]) then MLP head."""
    F = feat
    x = x_ref[...]                                   # (N, F) stays in VMEM/vregs
    adj_bias = adj_ref[...].astype(jnp.float32)      # (N, N) additive mask (bf16 in HBM)

    for l in range(num_layers):
        # Single MXU push: z = [h | 1 | s_dst | s_src]  (BN of previous layer,
        # GATConv bias and score offsets are pre-folded into wc / brow).
        z = jnp.dot(x, wc_ref[l], preferred_element_type=jnp.float32) + brow_ref[l]
        s_dst = z[:, F + 1:F + 2]                    # (N, 1)
        s_src = z[:, F + 2:F + 3]                    # (N, 1)
        # e[i, j] = LeakyReLU(s_dst[i] + s_src[j]) + mask(j -> i)
        e = s_dst + s_src.T                          # (N, N)
        e = jnp.maximum(e, _NEG_SLOPE * e) + adj_bias
        # online-safe softmax numerator; self loops keep each row max finite,
        # masked entries underflow to exactly 0.
        m = jnp.max(e, axis=-1, keepdims=True)
        p = jnp.exp(e - m)
        # Aggregate the UNNORMALIZED attention; the ones column of z yields the
        # softmax denominator in the same matmul (no alpha = p/denom pass).
        agg = jnp.dot(p, z, preferred_element_type=jnp.float32)   # (N, F+3)
        y = agg[:, :F] * pl.reciprocal(agg[:, F:F + 1], approx=True)
        x = jnp.maximum(y, 0.0)      # ReLU; BN folded into next layer's weights
        # F.dropout(p=0.1) is identity in eval mode.

    # MLP head: lin1 -> ReLU -> (lin2 o lin3 composed, lane-padded to 128).
    y = jnp.dot(x, w1_ref[...], preferred_element_type=jnp.float32) + b1_ref[...]
    y = jnp.maximum(y, 0.0)
    y = jnp.dot(y, w23_ref[...], preferred_element_type=jnp.float32) + b23_ref[...]
    if cls:
        # Padded classes carry bias -1e30 -> exp underflows to 0; the
        # log_softmax over the real classes is exact.
        m = jnp.max(y, axis=-1, keepdims=True)
        z = y - m
        lse = jnp.log(jnp.sum(jnp.exp(z), axis=-1, keepdims=True))
        y = z - lse
    out_ref[...] = y   # lane-dense store (last dim is a multiple of 128)


def gat_forward(pos, adj, params, cls=True):
    n = pos.shape[0]
    convs = params["convs"]
    head = params["head"]
    f32 = jnp.float32

    inp = convs[0]["w"].shape[0]
    inter = convs[0]["w"].shape[1]
    assert inp <= inter, "input feature dim must not exceed inter_dim"
    oup = head["w3"].shape[1]
    oup_pad = ((oup + 127) // 128) * 128
    pad = oup_pad - oup

    # ---- wrapper-side preprocessing (pure JAX glue, folded by XLA) --------
    # Additive adjacency bias, stored bf16 (only O(N^2) HBM stream).
    adj_bias = jnp.where(adj > 0.0, 0.0, _MASK).astype(jnp.bfloat16)
    # Lane-pad the input features to inter_dim (extra weight rows are zero).
    x0 = jnp.pad(pos.astype(f32), ((0, 0), (0, inter - inp)))

    # Fold BN (eval: running stats) of layer l-1 into layer l's combined weight.
    g_prev = jnp.ones((inter,), f32)          # identity "previous BN" for layer 1
    shift_prev = jnp.zeros((1, inter), f32)
    wcs, brows = [], []
    for conv in convs:
        w = conv["w"].astype(f32)
        fin = w.shape[0]
        w_pad = jnp.pad(w, ((0, inter - fin), (0, 0)))        # (inter, F)
        wp = w_pad * g_prev[:, None]                          # diag(g_prev) @ W
        sW = shift_prev @ w_pad                               # (1, F)
        a_dst_col = wp @ conv["att_dst"].T                    # (inter, 1)
        a_src_col = wp @ conv["att_src"].T                    # (inter, 1)
        wc = jnp.concatenate(
            [wp, jnp.zeros((inter, 1), f32), a_dst_col, a_src_col], axis=1)
        brow = jnp.concatenate(
            [sW + conv["bias"], jnp.ones((1, 1), f32),
             sW @ conv["att_dst"].T, sW @ conv["att_src"].T], axis=1)
        wcs.append(wc)
        brows.append(brow)
        g_prev = (conv["gamma"] / jnp.sqrt(conv["var"] + _BN_EPS)).reshape(-1)
        shift_prev = conv["beta"] - conv["mean"] * g_prev.reshape(1, -1)
    wc_all = jnp.stack(wcs)            # (L, inter, inter+3)
    brow_all = jnp.stack(brows)        # (L, 1, inter+3)

    # Fold the last BN into lin1; compose lin2 o lin3 (no ReLU between them);
    # lane-pad the class dim to 128 with -1e30 bias so log_softmax stays exact.
    w1 = head["w1"] * g_prev[:, None]
    b1 = shift_prev @ head["w1"] + head["b1"]
    w3p = jnp.pad(head["w3"], ((0, 0), (0, pad)))
    b3p = jnp.concatenate([head["b3"], jnp.full((1, pad), _MASK, f32)], axis=1)
    w23 = head["w2"] @ w3p
    b23 = head["b2"] @ w3p + b3p

    out_pad = pl.pallas_call(
        functools.partial(_gat_fused_kernel, num_layers=len(convs),
                          feat=inter, cls=cls),
        out_shape=jax.ShapeDtypeStruct((n, oup_pad), f32),
        in_specs=[_VMEM] * 8,
        out_specs=_VMEM,
    )(x0, adj_bias, wc_all, brow_all, w1, b1, w23, b23)
    return out_pad[:, :oup]


def _glorot(key, shape):
    lim = jnp.sqrt(6.0 / (shape[0] + shape[-1]))
    return jax.random.uniform(key, shape, jnp.float32, -lim, lim)


def init_gat_params(key, inp_dim, inter_dim, oup_dim):
    keys = jax.random.split(key, 32)
    ki = iter(keys)
    params = {"convs": []}
    dims = [(inp_dim, inter_dim)] + [(inter_dim, inter_dim)] * 3
    for fin, fout in dims:
        params["convs"].append({
            "w": _glorot(next(ki), (fin, fout)),
            "att_src": _glorot(next(ki), (1, fout)),
            "att_dst": _glorot(next(ki), (1, fout)),
            "bias": jnp.zeros((1, fout), jnp.float32),        # GATConv bias init
            "gamma": jax.random.uniform(next(ki), (1, fout), jnp.float32, 0.5, 1.5),
            "beta": jax.random.uniform(next(ki), (1, fout), jnp.float32, -0.1, 0.1),
            "mean": jnp.zeros((1, fout), jnp.float32),        # BN running_mean
            "var": jnp.ones((1, fout), jnp.float32),          # BN running_var
        })
    params["head"] = {
        "w1": _glorot(next(ki), (inter_dim, inter_dim)),
        "b1": jax.random.uniform(next(ki), (1, inter_dim), jnp.float32, -0.1, 0.1),
        "w2": _glorot(next(ki), (inter_dim, inter_dim)),
        "b2": jax.random.uniform(next(ki), (1, inter_dim), jnp.float32, -0.1, 0.1),
        "w3": _glorot(next(ki), (inter_dim, oup_dim)),
        "b3": jax.random.uniform(next(ki), (1, oup_dim), jnp.float32, -0.1, 0.1),
    }
    return params


if __name__ == "__main__":
    N = 64                        # number of graph nodes
    INP, INTER, OUP = 3, 32, 10   # data.pos is 3-D -> inp_dim = 3
    CLS = True

    key = jax.random.PRNGKey(0)
    kpos, kparam = jax.random.split(key)
    pos = jax.random.normal(kpos, (N, INP), jnp.float32)

    # Deterministic 3-regular directed graph: i -> (i+1), (i+3), (i+7) mod N.
    src = jnp.concatenate([jnp.arange(N)] * 3)
    dst = jnp.concatenate([(jnp.arange(N) + k) % N for k in (1, 3, 7)])
    edge_index = jnp.stack([src, dst]).astype(jnp.int32)   # (2, 192)

    # Densify edge_index into an adjacency mask (glue, outside the kernel).
    adj = jnp.zeros((N, N), jnp.float32)
    adj = adj.at[edge_index[1], edge_index[0]].set(1.0)    # edge j -> i
    adj = adj.at[jnp.arange(N), jnp.arange(N)].set(1.0)    # add_self_loops

    params = init_gat_params(kparam, INP, INTER, OUP)
    out = gat_forward(pos, adj, params, cls=CLS)
    out = jax.block_until_ready(out)
    assert out.shape == (N, OUP) and out.dtype == jnp.float32
    assert bool(jnp.all(jnp.isfinite(out)))
    print("KERNEL_OK")
</pallas_src>

<mosaic_0001>
module attributes {stable_mosaic.version = 11 : i64} {
  func.func @_gat_fused_kernel(%arg0: memref<64x32xf32, #tpu.memory_space<vmem>>, %arg1: memref<64x64xbf16, #tpu.memory_space<vmem>>, %arg2: memref<4x32x35xf32, #tpu.memory_space<vmem>>, %arg3: memref<4x1x35xf32, #tpu.memory_space<vmem>>, %arg4: memref<32x32xf32, #tpu.memory_space<vmem>>, %arg5: memref<1x32xf32, #tpu.memory_space<vmem>>, %arg6: memref<32x128xf32, #tpu.memory_space<vmem>>, %arg7: memref<1x128xf32, #tpu.memory_space<vmem>>, %arg8: memref<64x128xf32, #tpu.memory_space<vmem>>) attributes {dimension_semantics = [], scalar_prefetch = 0 : i64, scratch_operands = 0 : i64, tpu.core_type = #tpu.core_type<tc>} {
    %c0 = arith.constant 0 : index
    %c0_0 = arith.constant 0 : index
    %0 = vector.load %arg0[%c0, %c0_0] : memref<64x32xf32, #tpu.memory_space<vmem>>, vector<64x32xf32>
    %c0_1 = arith.constant 0 : index
    %c0_2 = arith.constant 0 : index
    %1 = vector.load %arg1[%c0_1, %c0_2] : memref<64x64xbf16, #tpu.memory_space<vmem>>, vector<64x64xbf16>
    %2 = arith.extf %1 : vector<64x64xbf16> to vector<64x64xf32>
    %c0_3 = arith.constant 0 : index
    %c0_4 = arith.constant 0 : index
    %c0_5 = arith.constant 0 : index
    %3 = vector.load %arg2[%c0_3, %c0_4, %c0_5] : memref<4x32x35xf32, #tpu.memory_space<vmem>>, vector<1x32x35xf32>
    %4 = vector.shape_cast %3 : vector<1x32x35xf32> to vector<32x35xf32>
    %cst = arith.constant dense<0.000000e+00> : vector<64x35xf32>
    %5 = tpu.matmul %0, %4, %cst {dimension_numbers = #tpu.dot_dimension_numbers<[1], [0], [0], [1], [0, 0, 1, 1], [], []>} : vector<64x32xf32>, vector<32x35xf32>, vector<64x35xf32> -> vector<64x35xf32>
    %c0_6 = arith.constant 0 : index
    %c0_7 = arith.constant 0 : index
    %c0_8 = arith.constant 0 : index
    %6 = vector.load %arg3[%c0_6, %c0_7, %c0_8] : memref<4x1x35xf32, #tpu.memory_space<vmem>>, vector<1x1x35xf32>
    %7 = vector.shape_cast %6 : vector<1x1x35xf32> to vector<1x35xf32>
    %8 = vector.broadcast %7 : vector<1x35xf32> to vector<64x35xf32>
    %9 = arith.addf %5, %8 : vector<64x35xf32>
    %10 = vector.extract_strided_slice %9 {offsets = [0, 33], sizes = [64, 1], strides = [1, 1]} : vector<64x35xf32> to vector<64x1xf32>
    %11 = vector.extract_strided_slice %9 {offsets = [0, 34], sizes = [64, 1], strides = [1, 1]} : vector<64x35xf32> to vector<64x1xf32>
    %12 = tpu.transpose %11, [1, 0] : vector<64x1xf32> -> vector<1x64xf32>
    %13 = vector.broadcast %10 : vector<64x1xf32> to vector<64x64xf32>
    %14 = vector.broadcast %12 : vector<1x64xf32> to vector<64x64xf32>
    %15 = arith.addf %13, %14 : vector<64x64xf32>
    %cst_9 = arith.constant 2.000000e-01 : f32
    %16 = vector.broadcast %cst_9 : f32 to vector<64x64xf32>
    %17 = arith.mulf %16, %15 : vector<64x64xf32>
    %18 = arith.maximumf %15, %17 : vector<64x64xf32>
    %19 = arith.addf %18, %2 : vector<64x64xf32>
    %cst_10 = arith.constant dense<0xFF800000> : vector<64xf32>
    %20 = vector.multi_reduction <maximumf>, %19, %cst_10 [1] : vector<64x64xf32> to vector<64xf32>
    %21 = vector.shape_cast %20 : vector<64xf32> to vector<64x1xf32>
    %22 = vector.broadcast %21 : vector<64x1xf32> to vector<64x64xf32>
    %23 = arith.subf %19, %22 : vector<64x64xf32>
    %24 = math.exp %23 : vector<64x64xf32>
    %cst_11 = arith.constant dense<0.000000e+00> : vector<64x35xf32>
    %25 = tpu.matmul %24, %9, %cst_11 {dimension_numbers = #tpu.dot_dimension_numbers<[1], [0], [0], [1], [0, 0, 1, 1], [], []>} : vector<64x64xf32>, vector<64x35xf32>, vector<64x35xf32> -> vector<64x35xf32>
    %26 = vector.extract_strided_slice %25 {offsets = [0, 0], sizes = [64, 32], strides = [1, 1]} : vector<64x35xf32> to vector<64x32xf32>
    %27 = vector.extract_strided_slice %25 {offsets = [0, 32], sizes = [64, 1], strides = [1, 1]} : vector<64x35xf32> to vector<64x1xf32>
    %28 = tpu.reciprocal %27 {approx = true} : vector<64x1xf32> -> vector<64x1xf32>
    %29 = vector.broadcast %28 : vector<64x1xf32> to vector<64x32xf32>
    %30 = arith.mulf %26, %29 : vector<64x32xf32>
    %cst_12 = arith.constant 0.000000e+00 : f32
    %31 = vector.broadcast %cst_12 : f32 to vector<64x32xf32>
    %32 = arith.maximumf %30, %31 : vector<64x32xf32>
    %c1 = arith.constant 1 : index
    %c0_13 = arith.constant 0 : index
    %c0_14 = arith.constant 0 : index
    %33 = vector.load %arg2[%c1, %c0_13, %c0_14] : memref<4x32x35xf32, #tpu.memory_space<vmem>>, vector<1x32x35xf32>
    %34 = vector.shape_cast %33 : vector<1x32x35xf32> to vector<32x35xf32>
    %cst_15 = arith.constant dense<0.000000e+00> : vector<64x35xf32>
    %35 = tpu.matmul %32, %34, %cst_15 {dimension_numbers = #tpu.dot_dimension_numbers<[1], [0], [0], [1], [0, 0, 1, 1], [], []>} : vector<64x32xf32>, vector<32x35xf32>, vector<64x35xf32> -> vector<64x35xf32>
    %c1_16 = arith.constant 1 : index
    %c0_17 = arith.constant 0 : index
    %c0_18 = arith.constant 0 : index
    %36 = vector.load %arg3[%c1_16, %c0_17, %c0_18] : memref<4x1x35xf32, #tpu.memory_space<vmem>>, vector<1x1x35xf32>
    %37 = vector.shape_cast %36 : vector<1x1x35xf32> to vector<1x35xf32>
    %38 = vector.broadcast %37 : vector<1x35xf32> to vector<64x35xf32>
    %39 = arith.addf %35, %38 : vector<64x35xf32>
    %40 = vector.extract_strided_slice %39 {offsets = [0, 33], sizes = [64, 1], strides = [1, 1]} : vector<64x35xf32> to vector<64x1xf32>
    %41 = vector.extract_strided_slice %39 {offsets = [0, 34], sizes = [64, 1], strides = [1, 1]} : vector<64x35xf32> to vector<64x1xf32>
    %42 = tpu.transpose %41, [1, 0] : vector<64x1xf32> -> vector<1x64xf32>
    %43 = vector.broadcast %40 : vector<64x1xf32> to vector<64x64xf32>
    %44 = vector.broadcast %42 : vector<1x64xf32> to vector<64x64xf32>
    %45 = arith.addf %43, %44 : vector<64x64xf32>
    %cst_19 = arith.constant 2.000000e-01 : f32
    %46 = vector.broadcast %cst_19 : f32 to vector<64x64xf32>
    %47 = arith.mulf %46, %45 : vector<64x64xf32>
    %48 = arith.maximumf %45, %47 : vector<64x64xf32>
    %49 = arith.addf %48, %2 : vector<64x64xf32>
    %cst_20 = arith.constant dense<0xFF800000> : vector<64xf32>
    %50 = vector.multi_reduction <maximumf>, %49, %cst_20 [1] : vector<64x64xf32> to vector<64xf32>
    %51 = vector.shape_cast %50 : vector<64xf32> to vector<64x1xf32>
    %52 = vector.broadcast %51 : vector<64x1xf32> to vector<64x64xf32>
    %53 = arith.subf %49, %52 : vector<64x64xf32>
    %54 = math.exp %53 : vector<64x64xf32>
    %cst_21 = arith.constant dense<0.000000e+00> : vector<64x35xf32>
    %55 = tpu.matmul %54, %39, %cst_21 {dimension_numbers = #tpu.dot_dimension_numbers<[1], [0], [0], [1], [0, 0, 1, 1], [], []>} : vector<64x64xf32>, vector<64x35xf32>, vector<64x35xf32> -> vector<64x35xf32>
    %56 = vector.extract_strided_slice %55 {offsets = [0, 0], sizes = [64, 32], strides = [1, 1]} : vector<64x35xf32> to vector<64x32xf32>
    %57 = vector.extract_strided_slice %55 {offsets = [0, 32], sizes = [64, 1], strides = [1, 1]} : vector<64x35xf32> to vector<64x1xf32>
    %58 = tpu.reciprocal %57 {approx = true} : vector<64x1xf32> -> vector<64x1xf32>
    %59 = vector.broadcast %58 : vector<64x1xf32> to vector<64x32xf32>
    %60 = arith.mulf %56, %59 : vector<64x32xf32>
    %cst_22 = arith.constant 0.000000e+00 : f32
    %61 = vector.broadcast %cst_22 : f32 to vector<64x32xf32>
    %62 = arith.maximumf %60, %61 : vector<64x32xf32>
    %c2 = arith.constant 2 : index
    %c0_23 = arith.constant 0 : index
    %c0_24 = arith.constant 0 : index
    %63 = vector.load %arg2[%c2, %c0_23, %c0_24] : memref<4x32x35xf32, #tpu.memory_space<vmem>>, vector<1x32x35xf32>
    %64 = vector.shape_cast %63 : vector<1x32x35xf32> to vector<32x35xf32>
    %cst_25 = arith.constant dense<0.000000e+00> : vector<64x35xf32>
    %65 = tpu.matmul %62, %64, %cst_25 {dimension_numbers = #tpu.dot_dimension_numbers<[1], [0], [0], [1], [0, 0, 1, 1], [], []>} : vector<64x32xf32>, vector<32x35xf32>, vector<64x35xf32> -> vector<64x35xf32>
    %c2_26 = arith.constant 2 : index
    %c0_27 = arith.constant 0 : index
    %c0_28 = arith.constant 0 : index
    %66 = vector.load %arg3[%c2_26, %c0_27, %c0_28] : memref<4x1x35xf32, #tpu.memory_space<vmem>>, vector<1x1x35xf32>
    %67 = vector.shape_cast %66 : vector<1x1x35xf32> to vector<1x35xf32>
    %68 = vector.broadcast %67 : vector<1x35xf32> to vector<64x35xf32>
    %69 = arith.addf %65, %68 : vector<64x35xf32>
    %70 = vector.extract_strided_slice %69 {offsets = [0, 33], sizes = [64, 1], strides = [1, 1]} : vector<64x35xf32> to vector<64x1xf32>
    %71 = vector.extract_strided_slice %69 {offsets = [0, 34], sizes = [64, 1], strides = [1, 1]} : vector<64x35xf32> to vector<64x1xf32>
    %72 = tpu.transpose %71, [1, 0] : vector<64x1xf32> -> vector<1x64xf32>
    %73 = vector.broadcast %70 : vector<64x1xf32> to vector<64x64xf32>
    %74 = vector.broadcast %72 : vector<1x64xf32> to vector<64x64xf32>
    %75 = arith.addf %73, %74 : vector<64x64xf32>
    %cst_29 = arith.constant 2.000000e-01 : f32
    %76 = vector.broadcast %cst_29 : f32 to vector<64x64xf32>
    %77 = arith.mulf %76, %75 : vector<64x64xf32>
    %78 = arith.maximumf %75, %77 : vector<64x64xf32>
    %79 = arith.addf %78, %2 : vector<64x64xf32>
    %cst_30 = arith.constant dense<0xFF800000> : vector<64xf32>
    %80 = vector.multi_reduction <maximumf>, %79, %cst_30 [1] : vector<64x64xf32> to vector<64xf32>
    %81 = vector.shape_cast %80 : vector<64xf32> to vector<64x1xf32>
    %82 = vector.broadcast %81 : vector<64x1xf32> to vector<64x64xf32>
    %83 = arith.subf %79, %82 : vector<64x64xf32>
    %84 = math.exp %83 : vector<64x64xf32>
    %cst_31 = arith.constant dense<0.000000e+00> : vector<64x35xf32>
    %85 = tpu.matmul %84, %69, %cst_31 {dimension_numbers = #tpu.dot_dimension_numbers<[1], [0], [0], [1], [0, 0, 1, 1], [], []>} : vector<64x64xf32>, vector<64x35xf32>, vector<64x35xf32> -> vector<64x35xf32>
    %86 = vector.extract_strided_slice %85 {offsets = [0, 0], sizes = [64, 32], strides = [1, 1]} : vector<64x35xf32> to vector<64x32xf32>
    %87 = vector.extract_strided_slice %85 {offsets = [0, 32], sizes = [64, 1], strides = [1, 1]} : vector<64x35xf32> to vector<64x1xf32>
    %88 = tpu.reciprocal %87 {approx = true} : vector<64x1xf32> -> vector<64x1xf32>
    %89 = vector.broadcast %88 : vector<64x1xf32> to vector<64x32xf32>
    %90 = arith.mulf %86, %89 : vector<64x32xf32>
    %cst_32 = arith.constant 0.000000e+00 : f32
    %91 = vector.broadcast %cst_32 : f32 to vector<64x32xf32>
    %92 = arith.maximumf %90, %91 : vector<64x32xf32>
    %c3 = arith.constant 3 : index
    %c0_33 = arith.constant 0 : index
    %c0_34 = arith.constant 0 : index
    %93 = vector.load %arg2[%c3, %c0_33, %c0_34] : memref<4x32x35xf32, #tpu.memory_space<vmem>>, vector<1x32x35xf32>
    %94 = vector.shape_cast %93 : vector<1x32x35xf32> to vector<32x35xf32>
    %cst_35 = arith.constant dense<0.000000e+00> : vector<64x35xf32>
    %95 = tpu.matmul %92, %94, %cst_35 {dimension_numbers = #tpu.dot_dimension_numbers<[1], [0], [0], [1], [0, 0, 1, 1], [], []>} : vector<64x32xf32>, vector<32x35xf32>, vector<64x35xf32> -> vector<64x35xf32>
    %c3_36 = arith.constant 3 : index
    %c0_37 = arith.constant 0 : index
    %c0_38 = arith.constant 0 : index
    %96 = vector.load %arg3[%c3_36, %c0_37, %c0_38] : memref<4x1x35xf32, #tpu.memory_space<vmem>>, vector<1x1x35xf32>
    %97 = vector.shape_cast %96 : vector<1x1x35xf32> to vector<1x35xf32>
    %98 = vector.broadcast %97 : vector<1x35xf32> to vector<64x35xf32>
    %99 = arith.addf %95, %98 : vector<64x35xf32>
    %100 = vector.extract_strided_slice %99 {offsets = [0, 33], sizes = [64, 1], strides = [1, 1]} : vector<64x35xf32> to vector<64x1xf32>
    %101 = vector.extract_strided_slice %99 {offsets = [0, 34], sizes = [64, 1], strides = [1, 1]} : vector<64x35xf32> to vector<64x1xf32>
    %102 = tpu.transpose %101, [1, 0] : vector<64x1xf32> -> vector<1x64xf32>
    %103 = vector.broadcast %100 : vector<64x1xf32> to vector<64x64xf32>
    %104 = vector.broadcast %102 : vector<1x64xf32> to vector<64x64xf32>
    %105 = arith.addf %103, %104 : vector<64x64xf32>
    %cst_39 = arith.constant 2.000000e-01 : f32
    %106 = vector.broadcast %cst_39 : f32 to vector<64x64xf32>
    %107 = arith.mulf %106, %105 : vector<64x64xf32>
    %108 = arith.maximumf %105, %107 : vector<64x64xf32>
    %109 = arith.addf %108, %2 : vector<64x64xf32>
    %cst_40 = arith.constant dense<0xFF800000> : vector<64xf32>
    %110 = vector.multi_reduction <maximumf>, %109, %cst_40 [1] : vector<64x64xf32> to vector<64xf32>
    %111 = vector.shape_cast %110 : vector<64xf32> to vector<64x1xf32>
    %112 = vector.broadcast %111 : vector<64x1xf32> to vector<64x64xf32>
    %113 = arith.subf %109, %112 : vector<64x64xf32>
    %114 = math.exp %113 : vector<64x64xf32>
    %cst_41 = arith.constant dense<0.000000e+00> : vector<64x35xf32>
    %115 = tpu.matmul %114, %99, %cst_41 {dimension_numbers = #tpu.dot_dimension_numbers<[1], [0], [0], [1], [0, 0, 1, 1], [], []>} : vector<64x64xf32>, vector<64x35xf32>, vector<64x35xf32> -> vector<64x35xf32>
    %116 = vector.extract_strided_slice %115 {offsets = [0, 0], sizes = [64, 32], strides = [1, 1]} : vector<64x35xf32> to vector<64x32xf32>
    %117 = vector.extract_strided_slice %115 {offsets = [0, 32], sizes = [64, 1], strides = [1, 1]} : vector<64x35xf32> to vector<64x1xf32>
    %118 = tpu.reciprocal %117 {approx = true} : vector<64x1xf32> -> vector<64x1xf32>
    %119 = vector.broadcast %118 : vector<64x1xf32> to vector<64x32xf32>
    %120 = arith.mulf %116, %119 : vector<64x32xf32>
    %cst_42 = arith.constant 0.000000e+00 : f32
    %121 = vector.broadcast %cst_42 : f32 to vector<64x32xf32>
    %122 = arith.maximumf %120, %121 : vector<64x32xf32>
    %c0_43 = arith.constant 0 : index
    %c0_44 = arith.constant 0 : index
    %123 = vector.load %arg4[%c0_43, %c0_44] : memref<32x32xf32, #tpu.memory_space<vmem>>, vector<32x32xf32>
    %cst_45 = arith.constant dense<0.000000e+00> : vector<64x32xf32>
    %124 = tpu.matmul %122, %123, %cst_45 {dimension_numbers = #tpu.dot_dimension_numbers<[1], [0], [0], [1], [0, 0, 1, 1], [], []>} : vector<64x32xf32>, vector<32x32xf32>, vector<64x32xf32> -> vector<64x32xf32>
    %c0_46 = arith.constant 0 : index
    %c0_47 = arith.constant 0 : index
    %125 = vector.load %arg5[%c0_46, %c0_47] : memref<1x32xf32, #tpu.memory_space<vmem>>, vector<1x32xf32>
    %126 = vector.broadcast %125 : vector<1x32xf32> to vector<64x32xf32>
    %127 = arith.addf %124, %126 : vector<64x32xf32>
    %cst_48 = arith.constant 0.000000e+00 : f32
    %128 = vector.broadcast %cst_48 : f32 to vector<64x32xf32>
    %129 = arith.maximumf %127, %128 : vector<64x32xf32>
    %c0_49 = arith.constant 0 : index
    %c0_50 = arith.constant 0 : index
    %130 = vector.load %arg6[%c0_49, %c0_50] : memref<32x128xf32, #tpu.memory_space<vmem>>, vector<32x128xf32>
    %cst_51 = arith.constant dense<0.000000e+00> : vector<64x128xf32>
    %131 = tpu.matmul %129, %130, %cst_51 {dimension_numbers = #tpu.dot_dimension_numbers<[1], [0], [0], [1], [0, 0, 1, 1], [], []>} : vector<64x32xf32>, vector<32x128xf32>, vector<64x128xf32> -> vector<64x128xf32>
    %c0_52 = arith.constant 0 : index
    %c0_53 = arith.constant 0 : index
    %132 = vector.load %arg7[%c0_52, %c0_53] : memref<1x128xf32, #tpu.memory_space<vmem>>, vector<1x128xf32>
    %133 = vector.broadcast %132 : vector<1x128xf32> to vector<64x128xf32>
    %134 = arith.addf %131, %133 : vector<64x128xf32>
    %cst_54 = arith.constant dense<0xFF800000> : vector<64xf32>
    %135 = vector.multi_reduction <maximumf>, %134, %cst_54 [1] : vector<64x128xf32> to vector<64xf32>
    %136 = vector.shape_cast %135 : vector<64xf32> to vector<64x1xf32>
    %137 = vector.broadcast %136 : vector<64x1xf32> to vector<64x128xf32>
    %138 = arith.subf %134, %137 : vector<64x128xf32>
    %139 = math.exp %138 : vector<64x128xf32>
    %cst_55 = arith.constant dense<0.000000e+00> : vector<64xf32>
    %140 = vector.multi_reduction <add>, %139, %cst_55 [1] : vector<64x128xf32> to vector<64xf32>
    %141 = vector.shape_cast %140 : vector<64xf32> to vector<64x1xf32>
    %142 = math.log %141 : vector<64x1xf32>
    %143 = vector.broadcast %142 : vector<64x1xf32> to vector<64x128xf32>
    %144 = arith.subf %138, %143 : vector<64x128xf32>
    %c0_56 = arith.constant 0 : index
    %c0_57 = arith.constant 0 : index
    %145 = vector.load %arg8[%c0_56, %c0_57] : memref<64x128xf32, #tpu.memory_space<vmem>>, vector<64x128xf32>
    tpu.vector_store %arg8[%c0_56, %c0_57], %144 {strides = array<i32>} : memref<64x128xf32, #tpu.memory_space<vmem>>, vector<64x128xf32>,
    return
  }
}

</mosaic_0001>

<llo_original>
// kernel: tpu_custom_call.1
$region0: #{tpu_custom_call.1}
  #allocation0 [shape = 'u32[]', space=smem, size = 0x4, offset = 0x4, fixed_abs, tag = 'smem constant byte address 0x4 - core index']
  #allocation1 [shape = 'u32[72,128]{1,0:T(1,128)}', space=vmem, size = 0x9000, scoped, tag = 'internal scratch']
  %s0 = inlined_call_operand.vmem [shape: f32[64,32], index: 0, kind: input, shape index: {}]
  %s1 = inlined_call_operand.vmem [shape: bf16[64,64], index: 1, kind: input, shape index: {}]
  %s2 = inlined_call_operand.hbm [shape: f32[4,32,35], index: 2, kind: input, shape index: {}]
  %s3 = inlined_call_operand.hbm [shape: f32[4,1,35], index: 3, kind: input, shape index: {}]
  %s4 = inlined_call_operand.vmem [shape: f32[32,32], index: 4, kind: input, shape index: {}]
  %s5 = inlined_call_operand.vmem [shape: f32[1,32], index: 5, kind: input, shape index: {}]
  %s6 = inlined_call_operand.vmem [shape: f32[32,128], index: 6, kind: input, shape index: {}]
  %s7 = inlined_call_operand.vmem [shape: f32[1,128], index: 7, kind: input, shape index: {}]
  %s8 = inlined_call_operand.hbm [shape: f32[64,128], index: 8, kind: output, shape index: {}]
  %s9 = sld [smem:[#allocation0]]
  $region50: #{tpu_custom_call.1} parent=0
    _
  %s11 = ssub.s32 1, %s9
  %s12 = scalar_select 0, %s11, %s9
  $region1: #{tpu_custom_call.1} parent=0
    #allocation2 [shape = 'u8[65536]{0}', space=vmem, size = 0x10000, scoped, tag = 'input window, operand 2, single buffered']
    #allocation3 [shape = 's32[1]{0}', space=sflag, size = 0x4, scoped, tag = 'scoped memory for tpu_custom_call.1']
    #allocation4 [shape = 's32[1]{0}', space=sflag, size = 0x4, scoped, tag = 'scoped memory for tpu_custom_call.1']
    #allocation5 [shape = 'u8[2048]{0}', space=vmem, size = 0x800, scoped, tag = 'input window, operand 3, single buffered']
    #allocation6 [shape = 's32[1]{0}', space=sflag, size = 0x4, scoped, tag = 'scoped memory for tpu_custom_call.1']
    #allocation7 [shape = 'u8[32768]{0}', space=vmem, size = 0x8000, scoped, tag = 'output window, operand 0, single buffered']
    %13 = vsyncpa [#allocation3], 0
    %14 = vsyncpa [#allocation6], 0
    %15 = vsyncpa [#allocation4], 0
    // Predicated region
    $region2: #{tpu_custom_call.1} parent=1 // pred_check
      _
    $region3: #{tpu_custom_call.1} parent=1 // pred_check_branch
      %17 = sbr.rel (0) target = $region5
    $region4: #{tpu_custom_call.1} parent=1 // pred_region
      _
    $region5: #{tpu_custom_call.1} parent=1 // pred_fallthru
      _
    // Predicated region
    $region6: #{tpu_custom_call.1} parent=1 // pred_check
      _
    $region7: #{tpu_custom_call.1} parent=1 // pred_check_branch
      %19 = sbr.rel (0) target = $region9
    $region8: #{tpu_custom_call.1} parent=1 // pred_region
      _
    $region9: #{tpu_custom_call.1} parent=1 // pred_fallthru
      _
    // Predicated region
    $region10: #{tpu_custom_call.1} parent=1 // pred_check
      _
    $region11: #{tpu_custom_call.1} parent=1 // pred_check_branch
      %21 = sbr.rel (0) target = $region13
    $region12: #{tpu_custom_call.1} parent=1 // pred_region
      %23 = vsyncadd [#allocation3], 0
      %s24 = sshll.u32 %s2, 4
      %s25 = int_to_ptr.hbm [resolvable:$true] %s24
      %s26 = sshll.u32 [#allocation2], 4
      %s27 = int_to_ptr.vmem [resolvable:$true] %s26
      %32 = dma.hbm_to_vmem [thread:$0]  %s25, 2048, %s27, [#allocation3], 128, 128, 8
    $region13: #{tpu_custom_call.1} parent=1 // pred_fallthru
      _
    // Predicated region
    $region14: #{tpu_custom_call.1} parent=1 // pred_check
      _
    $region15: #{tpu_custom_call.1} parent=1 // pred_check_branch
      %34 = sbr.rel (0) target = $region17
    $region16: #{tpu_custom_call.1} parent=1 // pred_region
      %36 = vsyncadd [#allocation6], 0
      %s37 = sshll.u32 %s3, 4
      %s38 = int_to_ptr.hbm [resolvable:$true] %s37
      %s39 = sshll.u32 [#allocation5], 4
      %s40 = int_to_ptr.vmem [resolvable:$true] %s39
      %45 = dma.hbm_to_vmem [thread:$0]  %s38, 64, %s40, [#allocation6], 16, 16, 1
    $region17: #{tpu_custom_call.1} parent=1 // pred_fallthru
      _
    // Predicated region
    $region18: #{tpu_custom_call.1} parent=1 // pred_check
      _
    $region19: #{tpu_custom_call.1} parent=1 // pred_check_branch
      %47 = sbr.rel (0) target = $region21
    $region20: #{tpu_custom_call.1} parent=1 // pred_region
      _
    $region21: #{tpu_custom_call.1} parent=1 // pred_fallthru
      _
    // Predicated region
    $region22: #{tpu_custom_call.1} parent=1 // pred_check
      _
    $region23: #{tpu_custom_call.1} parent=1 // pred_check_branch
      %49 = sbr.rel (0) target = $region25
    $region24: #{tpu_custom_call.1} parent=1 // pred_region
      _
    $region25: #{tpu_custom_call.1} parent=1 // pred_fallthru
      _
    // Predicated region
    $region26: #{tpu_custom_call.1} parent=1 // pred_check
      _
    $region27: #{tpu_custom_call.1} parent=1 // pred_check_branch
      %51 = sbr.rel (0) target = $region29
    $region28: #{tpu_custom_call.1} parent=1 // pred_region
      _
    $region29: #{tpu_custom_call.1} parent=1 // pred_fallthru
      _
    // Predicated region
    $region30: #{tpu_custom_call.1} parent=1 // pred_check
      _
    $region31: #{tpu_custom_call.1} parent=1 // pred_check_branch
      %53 = sbr.rel (0) target = $region33
    $region32: #{tpu_custom_call.1} parent=1 // pred_region
      _
    $region33: #{tpu_custom_call.1} parent=1 // pred_fallthru
      _
    // Predicated region
    $region34: #{tpu_custom_call.1} parent=1 // pred_check
      _
    $region35: #{tpu_custom_call.1} parent=1 // pred_check_branch
      %55 = sbr.rel (0) target = $region37
    $region36: #{tpu_custom_call.1} parent=1 // pred_region
      %57 = dma.done [#allocation3], 2048
    $region37: #{tpu_custom_call.1} parent=1 // pred_fallthru
      _
    // Predicated region
    $region38: #{tpu_custom_call.1} parent=1 // pred_check
      _
    $region39: #{tpu_custom_call.1} parent=1 // pred_check_branch
      %59 = sbr.rel (0) target = $region41
    $region40: #{tpu_custom_call.1} parent=1 // pred_region
      %61 = dma.done [#allocation6], 64
    $region41: #{tpu_custom_call.1} parent=1 // pred_fallthru
      _
    %v62 = vld [vmem:[%s0] sm:$0xff]
    %v63 = vld [vmem:[%s0 + $0x8] sm:$0xff]
    %v64 = vld [vmem:[%s0 + $0x10] sm:$0xff]
    %v65 = vld [vmem:[%s0 + $0x18] sm:$0xff]
    %v66 = vld [vmem:[%s0 + $0x20] sm:$0xff]
    %v67 = vld [vmem:[%s0 + $0x28] sm:$0xff]
    %v68 = vld [vmem:[%s0 + $0x30] sm:$0xff]
    %v69 = vld [vmem:[%s0 + $0x38] sm:$0xff]
    %v70 = vld [vmem:[%s1] sm:$0xf]
    %v71 = vld [vmem:[%s1 + $0x4] sm:$0xf]
    %v72 = vld [vmem:[%s1 + $0x8] sm:$0xf]
    %v73 = vld [vmem:[%s1 + $0xc] sm:$0xf]
    %v74 = vld [vmem:[%s1 + $0x10] sm:$0xf]
    %v75 = vld [vmem:[%s1 + $0x14] sm:$0xf]
    %v76 = vld [vmem:[%s1 + $0x18] sm:$0xf]
    %v77 = vld [vmem:[%s1 + $0x1c] sm:$0xf]
    %v78 = vunpack.c.l.bf16 %v70
    %v79 = vunpack.c.l.bf16 %v71
    %v80 = vunpack.c.l.bf16 %v72
    %v81 = vunpack.c.l.bf16 %v73
    %v82 = vunpack.c.l.bf16 %v74
    %v83 = vunpack.c.l.bf16 %v75
    %v84 = vunpack.c.l.bf16 %v76
    %v85 = vunpack.c.l.bf16 %v77
    %v86 = vld [vmem:[#allocation2] sm:$0xff]
    %v87 = vld [vmem:[#allocation2 + $0x8] sm:$0xff]
    %v88 = vld [vmem:[#allocation2 + $0x10] sm:$0xff]
    %v89 = vld [vmem:[#allocation2 + $0x18] sm:$0xff]
    %v90 = vld [vmem:[#allocation5] sm:$0x1]
    %v92 = vperm.slane %v90, 0
    %vm94 = vcmask 261120
    %v96 = vsel %vm94, %v62, 0
    %v99 = vsel %vm94, %v63, 0
    %v102 = vsel %vm94, %v64, 0
    %v105 = vsel %vm94, %v65, 0
    %v108 = vsel %vm94, %v66, 0
    %v111 = vsel %vm94, %v67, 0
    %v114 = vsel %vm94, %v68, 0
    %v117 = vsel %vm94, %v69, 0
    %119 = vmatpush.msra.mxu0 0.0
    %120 = vmatpush.msra.mxu0 0.0
    %121 = vmatpush.msra.mxu0 0.0
    %122 = vmatpush.msra.mxu0 0.0
    %123 = vmatpush.msra.mxu0 0.0
    %124 = vmatpush.msra.mxu0 0.0
    %125 = vmatpush.msra.mxu0 0.0
    %126 = vmatpush.msra.mxu0 0.0
    %127 = vmatpush.msra.mxu0 0.0
    %128 = vmatpush.msra.mxu0 0.0
    %129 = vmatpush.msra.mxu0 0.0
    %130 = vmatpush.msra.mxu0 0.0
    %131 = vmatpush.msra.mxu0 %v89
    %132 = vmatpush.msra.mxu0 %v88
    %133 = vmatpush.msra.mxu0 %v87
    %134 = vmatpush.msra.mxu0 %v86
    %135 = vmatmul.f32.gmra.mxu0 %v96
    %v136 = vpop.f32.mrf.mxu0
    %v137 = vadd.f32 %v92, %v136
    %138 = vmatmul.f32.gmra.mxu0 %v99
    %v139 = vpop.f32.mrf.mxu0
    %v140 = vadd.f32 %v92, %v139
    %141 = vmatmul.f32.gmra.mxu0 %v102
    %v142 = vpop.f32.mrf.mxu0
    %v143 = vadd.f32 %v92, %v142
    %144 = vmatmul.f32.gmra.mxu0 %v105
    %v145 = vpop.f32.mrf.mxu0
    %v146 = vadd.f32 %v92, %v145
    %147 = vmatmul.f32.gmra.mxu0 %v108
    %v148 = vpop.f32.mrf.mxu0
    %v149 = vadd.f32 %v92, %v148
    %150 = vmatmul.f32.gmra.mxu0 %v111
    %v151 = vpop.f32.mrf.mxu0
    %v152 = vadd.f32 %v92, %v151
    %153 = vmatmul.f32.gmra.mxu0 %v114
    %v154 = vpop.f32.mrf.mxu0
    %v155 = vadd.f32 %v92, %v154
    %156 = vmatmul.f32.gmra.mxu0 %v117
    %v157 = vpop.f32.mrf.mxu0
    %v158 = vadd.f32 %v92, %v157
    %159 = vdwg.mxu0
    %168 = vrot.lane.b32.xlu0 %v137, 94
    %v169 = vpop.permute.xlu0 %168
    %170 = vrot.lane.b32.xlu0 %v140, 94
    %v171 = vpop.permute.xlu0 %170
    %172 = vrot.lane.b32.xlu0 %v143, 94
    %v173 = vpop.permute.xlu0 %172
    %174 = vrot.lane.b32.xlu0 %v146, 94
    %v175 = vpop.permute.xlu0 %174
    %176 = vrot.lane.b32.xlu0 %v149, 94
    %v177 = vpop.permute.xlu0 %176
    %178 = vrot.lane.b32.xlu0 %v152, 94
    %v179 = vpop.permute.xlu0 %178
    %180 = vrot.lane.b32.xlu0 %v155, 94
    %v181 = vpop.permute.xlu0 %180
    %182 = vrot.lane.b32.xlu0 %v158, 94
    %v183 = vpop.permute.xlu0 %182
    %192 = vxpose.xlu0.b32.start [1/16] %v169, 128
    %193 = vxpose.xlu0.b32.cont [2/16] %v171, 128
    %194 = vxpose.xlu0.b32.cont [3/16] %v173, 128
    %195 = vxpose.xlu0.b32.cont [4/16] %v175, 128
    %196 = vxpose.xlu0.b32.cont [5/16] %v177, 128
    %197 = vxpose.xlu0.b32.cont [6/16] %v179, 128
    %198 = vxpose.xlu0.b32.cont [7/16] %v181, 128
    %199 = vxpose.xlu0.b32.cont [8/16] %v183, 128
    %200 = vxpose.xlu0.b32.cont [9/16] 0.0, 128
    %201 = vxpose.xlu0.b32.cont [10/16] 0.0, 128
    %202 = vxpose.xlu0.b32.cont [11/16] 0.0, 128
    %203 = vxpose.xlu0.b32.cont [12/16] 0.0, 128
    %204 = vxpose.xlu0.b32.cont [13/16] 0.0, 128
    %205 = vxpose.xlu0.b32.cont [14/16] 0.0, 128
    %206 = vxpose.xlu0.b32.cont [15/16] 0.0, 128
    %207 = vxpose.xlu0.b32.end [16/16] 0.0, 128
    %v208 = vpop.trf.xlu0
    %v209 = vpop.trf.xlu0
    %v210 = vpop.trf.xlu0
    %v211 = vpop.trf.xlu0
    %v212 = vpop.trf.xlu0
    %v213 = vpop.trf.xlu0
    %v214 = vpop.trf.xlu0
    %v215 = vpop.trf.xlu0
    %v216 = vpop.trf.xlu0
    %v217 = vpop.trf.xlu0
    %v218 = vpop.trf.xlu0
    %v219 = vpop.trf.xlu0
    %v220 = vpop.trf.xlu0
    %v221 = vpop.trf.xlu0
    %v222 = vpop.trf.xlu0
    %v223 = vpop.trf.xlu0
    %224 = vset.pattern.permute.xlu0 33
    %225 = vperm.xlu0 %224, %v137
    %v226 = vpop.permute.xlu0 %225
    %228 = vset.pattern.permute.xlu0 33
    %229 = vperm.xlu0 %228, %v140
    %v230 = vpop.permute.xlu0 %229
    %232 = vset.pattern.permute.xlu0 33
    %233 = vperm.xlu0 %232, %v143
    %v234 = vpop.permute.xlu0 %233
    %236 = vset.pattern.permute.xlu0 33
    %237 = vperm.xlu0 %236, %v146
    %v238 = vpop.permute.xlu0 %237
    %240 = vset.pattern.permute.xlu0 33
    %241 = vperm.xlu0 %240, %v149
    %v242 = vpop.permute.xlu0 %241
    %244 = vset.pattern.permute.xlu0 33
    %245 = vperm.xlu0 %244, %v152
    %v246 = vpop.permute.xlu0 %245
    %248 = vset.pattern.permute.xlu0 33
    %249 = vperm.xlu0 %248, %v155
    %v250 = vpop.permute.xlu0 %249
    %252 = vset.pattern.permute.xlu0 33
    %253 = vperm.xlu0 %252, %v158
    %v254 = vpop.permute.xlu0 %253
    %v256 = vperm.slane %v208, 0
    %v257 = vadd.f32 %v226, %v256
    %v258 = vadd.f32 %v230, %v256
    %v259 = vadd.f32 %v234, %v256
    %v260 = vadd.f32 %v238, %v256
    %v261 = vadd.f32 %v242, %v256
    %v262 = vadd.f32 %v246, %v256
    %v263 = vadd.f32 %v250, %v256
    %v264 = vadd.f32 %v254, %v256
    %v265 = vmul.f32 %v257, 0.2
    %v266 = vmul.f32 %v258, 0.2
    %v267 = vmul.f32 %v259, 0.2
    %v268 = vmul.f32 %v260, 0.2
    %v269 = vmul.f32 %v261, 0.2
    %v270 = vmul.f32 %v262, 0.2
    %v271 = vmul.f32 %v263, 0.2
    %v272 = vmul.f32 %v264, 0.2
    %v273 = vmax.f32 %v257, %v265
    %v274 = vmax.f32 %v258, %v266
    %v275 = vmax.f32 %v259, %v267
    %v276 = vmax.f32 %v260, %v268
    %v277 = vmax.f32 %v261, %v269
    %v278 = vmax.f32 %v262, %v270
    %v279 = vmax.f32 %v263, %v271
    %v280 = vmax.f32 %v264, %v272
    %v281 = vadd.f32 %v273, %v78
    %v282 = vadd.f32 %v274, %v79
    %v283 = vadd.f32 %v275, %v80
    %v284 = vadd.f32 %v276, %v81
    %v285 = vadd.f32 %v277, %v82
    %v286 = vadd.f32 %v278, %v83
    %v287 = vadd.f32 %v279, %v84
    %v288 = vadd.f32 %v280, %v85
    %vm289 = vcmask 523264
    %v290 = vsel %vm289, %v281, -inf
    %291 = vmax.xlane.f32.xlu0 %v290
    %v292 = vpop.xlane.xlu0 %291
    %v293 = vsel %vm289, %v282, -inf
    %294 = vmax.xlane.f32.xlu0 %v293
    %v295 = vpop.xlane.xlu0 %294
    %v296 = vsel %vm289, %v283, -inf
    %297 = vmax.xlane.f32.xlu0 %v296
    %v298 = vpop.xlane.xlu0 %297
    %v299 = vsel %vm289, %v284, -inf
    %300 = vmax.xlane.f32.xlu0 %v299
    %v301 = vpop.xlane.xlu0 %300
    %v302 = vsel %vm289, %v285, -inf
    %303 = vmax.xlane.f32.xlu0 %v302
    %v304 = vpop.xlane.xlu0 %303
    %v305 = vsel %vm289, %v286, -inf
    %306 = vmax.xlane.f32.xlu0 %v305
    %v307 = vpop.xlane.xlu0 %306
    %v308 = vsel %vm289, %v287, -inf
    %309 = vmax.xlane.f32.xlu0 %v308
    %v310 = vpop.xlane.xlu0 %309
    %v311 = vsel %vm289, %v288, -inf
    %312 = vmax.xlane.f32.xlu0 %v311
    %v313 = vpop.xlane.xlu0 %312
    %v314 = vsub.f32 %v281, %v292
    %v315 = vsub.f32 %v282, %v295
    %v316 = vsub.f32 %v283, %v298
    %v317 = vsub.f32 %v284, %v301
    %v318 = vsub.f32 %v285, %v304
    %v319 = vsub.f32 %v286, %v307
    %v320 = vsub.f32 %v287, %v310
    %v321 = vsub.f32 %v288, %v313
    %v322 = vmul.f32 %v314, 1.442695
    %v323 = vpow.pop %v322
    %v324 = vmul.f32 %v315, 1.442695
    %v325 = vpow.pop %v324
    %v326 = vmul.f32 %v316, 1.442695
    %v327 = vpow.pop %v326
    %v328 = vmul.f32 %v317, 1.442695
    %v329 = vpow.pop %v328
    %v330 = vmul.f32 %v318, 1.442695
    %v331 = vpow.pop %v330
    %v332 = vmul.f32 %v319, 1.442695
    %v333 = vpow.pop %v332
    %v334 = vmul.f32 %v320, 1.442695
    %v335 = vpow.pop %v334
    %v336 = vmul.f32 %v321, 1.442695
    %v337 = vpow.pop %v336
    %v339 = vsel %vm289, %v323, 0
    %v342 = vsel %vm289, %v325, 0
    %v345 = vsel %vm289, %v327, 0
    %v348 = vsel %vm289, %v329, 0
    %v351 = vsel %vm289, %v331, 0
    %v354 = vsel %vm289, %v333, 0
    %v357 = vsel %vm289, %v335, 0
    %v360 = vsel %vm289, %v337, 0
    %362 = vmatpush.msra.mxu0 0.0
    %363 = vmatpush.msra.mxu0 0.0
    %364 = vmatpush.msra.mxu0 0.0
    %365 = vmatpush.msra.mxu0 0.0
    %366 = vmatpush.msra.mxu0 0.0
    %367 = vmatpush.msra.mxu0 0.0
    %368 = vmatpush.msra.mxu0 0.0
    %369 = vmatpush.msra.mxu0 0.0
    %370 = vmatpush.msra.mxu0 %v158
    %371 = vmatpush.msra.mxu0 %v155
    %372 = vmatpush.msra.mxu0 %v152
    %373 = vmatpush.msra.mxu0 %v149
    %374 = vmatpush.msra.mxu0 %v146
    %375 = vmatpush.msra.mxu0 %v143
    %376 = vmatpush.msra.mxu0 %v140
    %377 = vmatpush.msra.mxu0 %v137
    %378 = vmatmul.f32.gmra.mxu0 %v339
    %v379 = vpop.f32.mrf.mxu0
    %v380 = vadd.f32 0.0, %v379
    %381 = vmatmul.f32.gmra.mxu0 %v342
    %v382 = vpop.f32.mrf.mxu0
    %v383 = vadd.f32 0.0, %v382
    %384 = vmatmul.f32.gmra.mxu0 %v345
    %v385 = vpop.f32.mrf.mxu0
    %v386 = vadd.f32 0.0, %v385
    %387 = vmatmul.f32.gmra.mxu0 %v348
    %v388 = vpop.f32.mrf.mxu0
    %v389 = vadd.f32 0.0, %v388
    %390 = vmatmul.f32.gmra.mxu0 %v351
    %v391 = vpop.f32.mrf.mxu0
    %v392 = vadd.f32 0.0, %v391
    %393 = vmatmul.f32.gmra.mxu0 %v354
    %v394 = vpop.f32.mrf.mxu0
    %v395 = vadd.f32 0.0, %v394
    %396 = vmatmul.f32.gmra.mxu0 %v357
    %v397 = vpop.f32.mrf.mxu0
    %v398 = vadd.f32 0.0, %v397
    %399 = vmatmul.f32.gmra.mxu0 %v360
    %v400 = vpop.f32.mrf.mxu0
    %v401 = vadd.f32 0.0, %v400
    %402 = vdwg.mxu0
    %v403 = vrcp.pop %v380
    %v404 = vrcp.pop %v383
    %v405 = vrcp.pop %v386
    %v406 = vrcp.pop %v389
    %v407 = vrcp.pop %v392
    %v408 = vrcp.pop %v395
    %v409 = vrcp.pop %v398
    %v410 = vrcp.pop %v401
    %412 = vset.pattern.permute.xlu0 32
    %413 = vperm.xlu0 %412, %v403
    %v414 = vpop.permute.xlu0 %413
    %417 = vset.pattern.permute.xlu0 32
    %418 = vperm.xlu0 %417, %v404
    %v419 = vpop.permute.xlu0 %418
    %422 = vset.pattern.permute.xlu0 32
    %423 = vperm.xlu0 %422, %v405
    %v424 = vpop.permute.xlu0 %423
    %427 = vset.pattern.permute.xlu0 32
    %428 = vperm.xlu0 %427, %v406
    %v429 = vpop.permute.xlu0 %428
    %432 = vset.pattern.permute.xlu0 32
    %433 = vperm.xlu0 %432, %v407
    %v434 = vpop.permute.xlu0 %433
    %437 = vset.pattern.permute.xlu0 32
    %438 = vperm.xlu0 %437, %v408
    %v439 = vpop.permute.xlu0 %438
    %442 = vset.pattern.permute.xlu0 32
    %443 = vperm.xlu0 %442, %v409
    %v444 = vpop.permute.xlu0 %443
    %447 = vset.pattern.permute.xlu0 32
    %448 = vperm.xlu0 %447, %v410
    %v449 = vpop.permute.xlu0 %448
    %v451 = vmul.f32 %v380, %v414
    %v452 = vmul.f32 %v383, %v419
    %v453 = vmul.f32 %v386, %v424
    %v454 = vmul.f32 %v389, %v429
    %v455 = vmul.f32 %v392, %v434
    %v456 = vmul.f32 %v395, %v439
    %v457 = vmul.f32 %v398, %v444
    %v458 = vmul.f32 %v401, %v449
    %v459 = vmax.f32 %v451, 0.0
    %v460 = vmax.f32 %v452, 0.0
    %v461 = vmax.f32 %v453, 0.0
    %v462 = vmax.f32 %v454, 0.0
    %v463 = vmax.f32 %v455, 0.0
    %v464 = vmax.f32 %v456, 0.0
    %v465 = vmax.f32 %v457, 0.0
    %v466 = vmax.f32 %v458, 0.0
    %s467 = scalar_lea.vmem [#allocation2], 32
    %v468 = vld [vmem:[%s467] sm:$0xff]
    %v469 = vld [vmem:[%s467 + $0x8] sm:$0xff]
    %v470 = vld [vmem:[%s467 + $0x10] sm:$0xff]
    %v471 = vld [vmem:[%s467 + $0x18] sm:$0xff]
    %s472 = scalar_lea.vmem [#allocation5], 1
    %v473 = vld [vmem:[%s472] sm:$0x1]
    %v475 = vperm.slane %v473, 0
    %v478 = vsel %vm94, %v459, 0
    %v481 = vsel %vm94, %v460, 0
    %v484 = vsel %vm94, %v461, 0
    %v487 = vsel %vm94, %v462, 0
    %v490 = vsel %vm94, %v463, 0
    %v493 = vsel %vm94, %v464, 0
    %v496 = vsel %vm94, %v465, 0
    %v499 = vsel %vm94, %v466, 0
    %501 = vmatpush.msra.mxu0 0.0
    %502 = vmatpush.msra.mxu0 0.0
    %503 = vmatpush.msra.mxu0 0.0
    %504 = vmatpush.msra.mxu0 0.0
    %505 = vmatpush.msra.mxu0 0.0
    %506 = vmatpush.msra.mxu0 0.0
    %507 = vmatpush.msra.mxu0 0.0
    %508 = vmatpush.msra.mxu0 0.0
    %509 = vmatpush.msra.mxu0 0.0
    %510 = vmatpush.msra.mxu0 0.0
    %511 = vmatpush.msra.mxu0 0.0
    %512 = vmatpush.msra.mxu0 0.0
    %513 = vmatpush.msra.mxu0 %v471
    %514 = vmatpush.msra.mxu0 %v470
    %515 = vmatpush.msra.mxu0 %v469
    %516 = vmatpush.msra.mxu0 %v468
    %517 = vmatmul.f32.gmra.mxu0 %v478
    %v518 = vpop.f32.mrf.mxu0
    %v519 = vadd.f32 %v475, %v518
    %520 = vmatmul.f32.gmra.mxu0 %v481
    %v521 = vpop.f32.mrf.mxu0
    %v522 = vadd.f32 %v475, %v521
    %523 = vmatmul.f32.gmra.mxu0 %v484
    %v524 = vpop.f32.mrf.mxu0
    %v525 = vadd.f32 %v475, %v524
    %526 = vmatmul.f32.gmra.mxu0 %v487
    %v527 = vpop.f32.mrf.mxu0
    %v528 = vadd.f32 %v475, %v527
    %529 = vmatmul.f32.gmra.mxu0 %v490
    %v530 = vpop.f32.mrf.mxu0
    %v531 = vadd.f32 %v475, %v530
    %532 = vmatmul.f32.gmra.mxu0 %v493
    %v533 = vpop.f32.mrf.mxu0
    %v534 = vadd.f32 %v475, %v533
    %535 = vmatmul.f32.gmra.mxu0 %v496
    %v536 = vpop.f32.mrf.mxu0
    %v537 = vadd.f32 %v475, %v536
    %538 = vmatmul.f32.gmra.mxu0 %v499
    %v539 = vpop.f32.mrf.mxu0
    %v540 = vadd.f32 %v475, %v539
    %541 = vdwg.mxu0
    %550 = vrot.lane.b32.xlu0 %v519, 94
    %v551 = vpop.permute.xlu0 %550
    %552 = vrot.lane.b32.xlu0 %v522, 94
    %v553 = vpop.permute.xlu0 %552
    %554 = vrot.lane.b32.xlu0 %v525, 94
    %v555 = vpop.permute.xlu0 %554
    %556 = vrot.lane.b32.xlu0 %v528, 94
    %v557 = vpop.permute.xlu0 %556
    %558 = vrot.lane.b32.xlu0 %v531, 94
    %v559 = vpop.permute.xlu0 %558
    %560 = vrot.lane.b32.xlu0 %v534, 94
    %v561 = vpop.permute.xlu0 %560
    %562 = vrot.lane.b32.xlu0 %v537, 94
    %v563 = vpop.permute.xlu0 %562
    %564 = vrot.lane.b32.xlu0 %v540, 94
    %v565 = vpop.permute.xlu0 %564
    %574 = vxpose.xlu0.b32.start [1/16] %v551, 128
    %575 = vxpose.xlu0.b32.cont [2/16] %v553, 128
    %576 = vxpose.xlu0.b32.cont [3/16] %v555, 128
    %577 = vxpose.xlu0.b32.cont [4/16] %v557, 128
    %578 = vxpose.xlu0.b32.cont [5/16] %v559, 128
    %579 = vxpose.xlu0.b32.cont [6/16] %v561, 128
    %580 = vxpose.xlu0.b32.cont [7/16] %v563, 128
    %581 = vxpose.xlu0.b32.cont [8/16] %v565, 128
    %582 = vxpose.xlu0.b32.cont [9/16] 0.0, 128
    %583 = vxpose.xlu0.b32.cont [10/16] 0.0, 128
    %584 = vxpose.xlu0.b32.cont [11/16] 0.0, 128
    %585 = vxpose.xlu0.b32.cont [12/16] 0.0, 128
    %586 = vxpose.xlu0.b32.cont [13/16] 0.0, 128
    %587 = vxpose.xlu0.b32.cont [14/16] 0.0, 128
    %588 = vxpose.xlu0.b32.cont [15/16] 0.0, 128
    %589 = vxpose.xlu0.b32.end [16/16] 0.0, 128
    %v590 = vpop.trf.xlu0
    %v591 = vpop.trf.xlu0
    %v592 = vpop.trf.xlu0
    %v593 = vpop.trf.xlu0
    %v594 = vpop.trf.xlu0
    %v595 = vpop.trf.xlu0
    %v596 = vpop.trf.xlu0
    %v597 = vpop.trf.xlu0
    %v598 = vpop.trf.xlu0
    %v599 = vpop.trf.xlu0
    %v600 = vpop.trf.xlu0
    %v601 = vpop.trf.xlu0
    %v602 = vpop.trf.xlu0
    %v603 = vpop.trf.xlu0
    %v604 = vpop.trf.xlu0
    %v605 = vpop.trf.xlu0
    %606 = vset.pattern.permute.xlu0 33
    %607 = vperm.xlu0 %606, %v519
    %v608 = vpop.permute.xlu0 %607
    %610 = vset.pattern.permute.xlu0 33
    %611 = vperm.xlu0 %610, %v522
    %v612 = vpop.permute.xlu0 %611
    %614 = vset.pattern.permute.xlu0 33
    %615 = vperm.xlu0 %614, %v525
    %v616 = vpop.permute.xlu0 %615
    %618 = vset.pattern.permute.xlu0 33
    %619 = vperm.xlu0 %618, %v528
    %v620 = vpop.permute.xlu0 %619
    %622 = vset.pattern.permute.xlu0 33
    %623 = vperm.xlu0 %622, %v531
    %v624 = vpop.permute.xlu0 %623
    %626 = vset.pattern.permute.xlu0 33
    %627 = vperm.xlu0 %626, %v534
    %v628 = vpop.permute.xlu0 %627
    %630 = vset.pattern.permute.xlu0 33
    %631 = vperm.xlu0 %630, %v537
    %v632 = vpop.permute.xlu0 %631
    %634 = vset.pattern.permute.xlu0 33
    %635 = vperm.xlu0 %634, %v540
    %v636 = vpop.permute.xlu0 %635
    %v638 = vperm.slane %v590, 0
    %v639 = vadd.f32 %v608, %v638
    %v640 = vadd.f32 %v612, %v638
    %v641 = vadd.f32 %v616, %v638
    %v642 = vadd.f32 %v620, %v638
    %v643 = vadd.f32 %v624, %v638
    %v644 = vadd.f32 %v628, %v638
    %v645 = vadd.f32 %v632, %v638
    %v646 = vadd.f32 %v636, %v638
    %v647 = vmul.f32 %v639, 0.2
    %v648 = vmul.f32 %v640, 0.2
    %v649 = vmul.f32 %v641, 0.2
    %v650 = vmul.f32 %v642, 0.2
    %v651 = vmul.f32 %v643, 0.2
    %v652 = vmul.f32 %v644, 0.2
    %v653 = vmul.f32 %v645, 0.2
    %v654 = vmul.f32 %v646, 0.2
    %v655 = vmax.f32 %v639, %v647
    %v656 = vmax.f32 %v640, %v648
    %v657 = vmax.f32 %v641, %v649
    %v658 = vmax.f32 %v642, %v650
    %v659 = vmax.f32 %v643, %v651
    %v660 = vmax.f32 %v644, %v652
    %v661 = vmax.f32 %v645, %v653
    %v662 = vmax.f32 %v646, %v654
    %v663 = vadd.f32 %v655, %v78
    %v664 = vadd.f32 %v656, %v79
    %v665 = vadd.f32 %v657, %v80
    %v666 = vadd.f32 %v658, %v81
    %v667 = vadd.f32 %v659, %v82
    %v668 = vadd.f32 %v660, %v83
    %v669 = vadd.f32 %v661, %v84
    %v670 = vadd.f32 %v662, %v85
    %v671 = vsel %vm289, %v663, -inf
    %672 = vmax.xlane.f32.xlu0 %v671
    %v673 = vpop.xlane.xlu0 %672
    %v674 = vsel %vm289, %v664, -inf
    %675 = vmax.xlane.f32.xlu0 %v674
    %v676 = vpop.xlane.xlu0 %675
    %v677 = vsel %vm289, %v665, -inf
    %678 = vmax.xlane.f32.xlu0 %v677
    %v679 = vpop.xlane.xlu0 %678
    %v680 = vsel %vm289, %v666, -inf
    %681 = vmax.xlane.f32.xlu0 %v680
    %v682 = vpop.xlane.xlu0 %681
    %v683 = vsel %vm289, %v667, -inf
    %684 = vmax.xlane.f32.xlu0 %v683
    %v685 = vpop.xlane.xlu0 %684
    %v686 = vsel %vm289, %v668, -inf
    %687 = vmax.xlane.f32.xlu0 %v686
    %v688 = vpop.xlane.xlu0 %687
    %v689 = vsel %vm289, %v669, -inf
    %690 = vmax.xlane.f32.xlu0 %v689
    %v691 = vpop.xlane.xlu0 %690
    %v692 = vsel %vm289, %v670, -inf
    %693 = vmax.xlane.f32.xlu0 %v692
    %v694 = vpop.xlane.xlu0 %693
    %v695 = vsub.f32 %v663, %v673
    %v696 = vsub.f32 %v664, %v676
    %v697 = vsub.f32 %v665, %v679
    %v698 = vsub.f32 %v666, %v682
    %v699 = vsub.f32 %v667, %v685
    %v700 = vsub.f32 %v668, %v688
    %v701 = vsub.f32 %v669, %v691
    %v702 = vsub.f32 %v670, %v694
    %v703 = vmul.f32 %v695, 1.442695
    %v704 = vpow.pop %v703
    %v705 = vmul.f32 %v696, 1.442695
    %v706 = vpow.pop %v705
    %v707 = vmul.f32 %v697, 1.442695
    %v708 = vpow.pop %v707
    %v709 = vmul.f32 %v698, 1.442695
    %v710 = vpow.pop %v709
    %v711 = vmul.f32 %v699, 1.442695
    %v712 = vpow.pop %v711
    %v713 = vmul.f32 %v700, 1.442695
    %v714 = vpow.pop %v713
    %v715 = vmul.f32 %v701, 1.442695
    %v716 = vpow.pop %v715
    %v717 = vmul.f32 %v702, 1.442695
    %v718 = vpow.pop %v717
    %v720 = vsel %vm289, %v704, 0
    %v723 = vsel %vm289, %v706, 0
    %v726 = vsel %vm289, %v708, 0
    %v729 = vsel %vm289, %v710, 0
    %v732 = vsel %vm289, %v712, 0
    %v735 = vsel %vm289, %v714, 0
    %v738 = vsel %vm289, %v716, 0
    %v741 = vsel %vm289, %v718, 0
    %743 = vmatpush.msra.mxu0 0.0
    %744 = vmatpush.msra.mxu0 0.0
    %745 = vmatpush.msra.mxu0 0.0
    %746 = vmatpush.msra.mxu0 0.0
    %747 = vmatpush.msra.mxu0 0.0
    %748 = vmatpush.msra.mxu0 0.0
    %749 = vmatpush.msra.mxu0 0.0
    %750 = vmatpush.msra.mxu0 0.0
    %751 = vmatpush.msra.mxu0 %v540
    %752 = vmatpush.msra.mxu0 %v537
    %753 = vmatpush.msra.mxu0 %v534
    %754 = vmatpush.msra.mxu0 %v531
    %755 = vmatpush.msra.mxu0 %v528
    %756 = vmatpush.msra.mxu0 %v525
    %757 = vmatpush.msra.mxu0 %v522
    %758 = vmatpush.msra.mxu0 %v519
    %759 = vmatmul.f32.gmra.mxu0 %v720
    %v760 = vpop.f32.mrf.mxu0
    %v761 = vadd.f32 0.0, %v760
    %762 = vmatmul.f32.gmra.mxu0 %v723
    %v763 = vpop.f32.mrf.mxu0
    %v764 = vadd.f32 0.0, %v763
    %765 = vmatmul.f32.gmra.mxu0 %v726
    %v766 = vpop.f32.mrf.mxu0
    %v767 = vadd.f32 0.0, %v766
    %768 = vmatmul.f32.gmra.mxu0 %v729
    %v769 = vpop.f32.mrf.mxu0
    %v770 = vadd.f32 0.0, %v769
    %771 = vmatmul.f32.gmra.mxu0 %v732
    %v772 = vpop.f32.mrf.mxu0
    %v773 = vadd.f32 0.0, %v772
    %774 = vmatmul.f32.gmra.mxu0 %v735
    %v775 = vpop.f32.mrf.mxu0
    %v776 = vadd.f32 0.0, %v775
    %777 = vmatmul.f32.gmra.mxu0 %v738
    %v778 = vpop.f32.mrf.mxu0
    %v779 = vadd.f32 0.0, %v778
    %780 = vmatmul.f32.gmra.mxu0 %v741
    %v781 = vpop.f32.mrf.mxu0
    %v782 = vadd.f32 0.0, %v781
    %783 = vdwg.mxu0
    %v784 = vrcp.pop %v761
    %v785 = vrcp.pop %v764
    %v786 = vrcp.pop %v767
    %v787 = vrcp.pop %v770
    %v788 = vrcp.pop %v773
    %v789 = vrcp.pop %v776
    %v790 = vrcp.pop %v779
    %v791 = vrcp.pop %v782
    %793 = vset.pattern.permute.xlu0 32
    %794 = vperm.xlu0 %793, %v784
    %v795 = vpop.permute.xlu0 %794
    %798 = vset.pattern.permute.xlu0 32
    %799 = vperm.xlu0 %798, %v785
    %v800 = vpop.permute.xlu0 %799
    %803 = vset.pattern.permute.xlu0 32
    %804 = vperm.xlu0 %803, %v786
    %v805 = vpop.permute.xlu0 %804
    %808 = vset.pattern.permute.xlu0 32
    %809 = vperm.xlu0 %808, %v787
    %v810 = vpop.permute.xlu0 %809
    %813 = vset.pattern.permute.xlu0 32
    %814 = vperm.xlu0 %813, %v788
    %v815 = vpop.permute.xlu0 %814
    %818 = vset.pattern.permute.xlu0 32
    %819 = vperm.xlu0 %818, %v789
    %v820 = vpop.permute.xlu0 %819
    %823 = vset.pattern.permute.xlu0 32
    %824 = vperm.xlu0 %823, %v790
    %v825 = vpop.permute.xlu0 %824
    %828 = vset.pattern.permute.xlu0 32
    %829 = vperm.xlu0 %828, %v791
    %v830 = vpop.permute.xlu0 %829
    %v832 = vmul.f32 %v761, %v795
    %v833 = vmul.f32 %v764, %v800
    %v834 = vmul.f32 %v767, %v805
    %v835 = vmul.f32 %v770, %v810
    %v836 = vmul.f32 %v773, %v815
    %v837 = vmul.f32 %v776, %v820
    %v838 = vmul.f32 %v779, %v825
    %v839 = vmul.f32 %v782, %v830
    %v840 = vmax.f32 %v832, 0.0
    %v841 = vmax.f32 %v833, 0.0
    %v842 = vmax.f32 %v834, 0.0
    %v843 = vmax.f32 %v835, 0.0
    %v844 = vmax.f32 %v836, 0.0
    %v845 = vmax.f32 %v837, 0.0
    %v846 = vmax.f32 %v838, 0.0
    %v847 = vmax.f32 %v839, 0.0
    %s848 = scalar_lea.vmem [#allocation2], 64
    %v849 = vld [vmem:[%s848] sm:$0xff]
    %v850 = vld [vmem:[%s848 + $0x8] sm:$0xff]
    %v851 = vld [vmem:[%s848 + $0x10] sm:$0xff]
    %v852 = vld [vmem:[%s848 + $0x18] sm:$0xff]
    %s853 = scalar_lea.vmem [#allocation5], 2
    %v854 = vld [vmem:[%s853] sm:$0x1]
    %v856 = vperm.slane %v854, 0
    %v859 = vsel %vm94, %v840, 0
    %v862 = vsel %vm94, %v841, 0
    %v865 = vsel %vm94, %v842, 0
    %v868 = vsel %vm94, %v843, 0
    %v871 = vsel %vm94, %v844, 0
    %v874 = vsel %vm94, %v845, 0
    %v877 = vsel %vm94, %v846, 0
    %v880 = vsel %vm94, %v847, 0
    %882 = vmatpush.msra.mxu0 0.0
    %883 = vmatpush.msra.mxu0 0.0
    %884 = vmatpush.msra.mxu0 0.0
    %885 = vmatpush.msra.mxu0 0.0
    %886 = vmatpush.msra.mxu0 0.0
    %887 = vmatpush.msra.mxu0 0.0
    %888 = vmatpush.msra.mxu0 0.0
    %889 = vmatpush.msra.mxu0 0.0
    %890 = vmatpush.msra.mxu0 0.0
    %891 = vmatpush.msra.mxu0 0.0
    %892 = vmatpush.msra.mxu0 0.0
    %893 = vmatpush.msra.mxu0 0.0
    %894 = vmatpush.msra.mxu0 %v852
    %895 = vmatpush.msra.mxu0 %v851
    %896 = vmatpush.msra.mxu0 %v850
    %897 = vmatpush.msra.mxu0 %v849
    %898 = vmatmul.f32.gmra.mxu0 %v859
    %v899 = vpop.f32.mrf.mxu0
    %v900 = vadd.f32 %v856, %v899
    %901 = vmatmul.f32.gmra.mxu0 %v862
    %v902 = vpop.f32.mrf.mxu0
    %v903 = vadd.f32 %v856, %v902
    %904 = vmatmul.f32.gmra.mxu0 %v865
    %v905 = vpop.f32.mrf.mxu0
    %v906 = vadd.f32 %v856, %v905
    %907 = vmatmul.f32.gmra.mxu0 %v868
    %v908 = vpop.f32.mrf.mxu0
    %v909 = vadd.f32 %v856, %v908
    %910 = vmatmul.f32.gmra.mxu0 %v871
    %v911 = vpop.f32.mrf.mxu0
    %v912 = vadd.f32 %v856, %v911
    %913 = vmatmul.f32.gmra.mxu0 %v874
    %v914 = vpop.f32.mrf.mxu0
    %v915 = vadd.f32 %v856, %v914
    %916 = vmatmul.f32.gmra.mxu0 %v877
    %v917 = vpop.f32.mrf.mxu0
    %v918 = vadd.f32 %v856, %v917
    %919 = vmatmul.f32.gmra.mxu0 %v880
    %v920 = vpop.f32.mrf.mxu0
    %v921 = vadd.f32 %v856, %v920
    %922 = vdwg.mxu0
    %931 = vrot.lane.b32.xlu0 %v900, 94
    %v932 = vpop.permute.xlu0 %931
    %933 = vrot.lane.b32.xlu0 %v903, 94
    %v934 = vpop.permute.xlu0 %933
    %935 = vrot.lane.b32.xlu0 %v906, 94
    %v936 = vpop.permute.xlu0 %935
    %937 = vrot.lane.b32.xlu0 %v909, 94
    %v938 = vpop.permute.xlu0 %937
    %939 = vrot.lane.b32.xlu0 %v912, 94
    %v940 = vpop.permute.xlu0 %939
    %941 = vrot.lane.b32.xlu0 %v915, 94
    %v942 = vpop.permute.xlu0 %941
    %943 = vrot.lane.b32.xlu0 %v918, 94
    %v944 = vpop.permute.xlu0 %943
    %945 = vrot.lane.b32.xlu0 %v921, 94
    %v946 = vpop.permute.xlu0 %945
    %955 = vxpose.xlu0.b32.start [1/16] %v932, 128
    %956 = vxpose.xlu0.b32.cont [2/16] %v934, 128
    %957 = vxpose.xlu0.b32.cont [3/16] %v936, 128
    %958 = vxpose.xlu0.b32.cont [4/16] %v938, 128
    %959 = vxpose.xlu0.b32.cont [5/16] %v940, 128
    %960 = vxpose.xlu0.b32.cont [6/16] %v942, 128
    %961 = vxpose.xlu0.b32.cont [7/16] %v944, 128
    %962 = vxpose.xlu0.b32.cont [8/16] %v946, 128
    %963 = vxpose.xlu0.b32.cont [9/16] 0.0, 128
    %964 = vxpose.xlu0.b32.cont [10/16] 0.0, 128
    %965 = vxpose.xlu0.b32.cont [11/16] 0.0, 128
    %966 = vxpose.xlu0.b32.cont [12/16] 0.0, 128
    %967 = vxpose.xlu0.b32.cont [13/16] 0.0, 128
    %968 = vxpose.xlu0.b32.cont [14/16] 0.0, 128
    %969 = vxpose.xlu0.b32.cont [15/16] 0.0, 128
    %970 = vxpose.xlu0.b32.end [16/16] 0.0, 128
    %v971 = vpop.trf.xlu0
    %v972 = vpop.trf.xlu0
    %v973 = vpop.trf.xlu0
    %v974 = vpop.trf.xlu0
    %v975 = vpop.trf.xlu0
    %v976 = vpop.trf.xlu0
    %v977 = vpop.trf.xlu0
    %v978 = vpop.trf.xlu0
    %v979 = vpop.trf.xlu0
    %v980 = vpop.trf.xlu0
    %v981 = vpop.trf.xlu0
    %v982 = vpop.trf.xlu0
    %v983 = vpop.trf.xlu0
    %v984 = vpop.trf.xlu0
    %v985 = vpop.trf.xlu0
    %v986 = vpop.trf.xlu0
    %987 = vset.pattern.permute.xlu0 33
    %988 = vperm.xlu0 %987, %v900
    %v989 = vpop.permute.xlu0 %988
    %991 = vset.pattern.permute.xlu0 33
    %992 = vperm.xlu0 %991, %v903
    %v993 = vpop.permute.xlu0 %992
    %995 = vset.pattern.permute.xlu0 33
    %996 = vperm.xlu0 %995, %v906
    %v997 = vpop.permute.xlu0 %996
    %999 = vset.pattern.permute.xlu0 33
    %1000 = vperm.xlu0 %999, %v909
    %v1001 = vpop.permute.xlu0 %1000
    %1003 = vset.pattern.permute.xlu0 33
    %1004 = vperm.xlu0 %1003, %v912
    %v1005 = vpop.permute.xlu0 %1004
    %1007 = vset.pattern.permute.xlu0 33
    %1008 = vperm.xlu0 %1007, %v915
    %v1009 = vpop.permute.xlu0 %1008
    %1011 = vset.pattern.permute.xlu0 33
    %1012 = vperm.xlu0 %1011, %v918
    %v1013 = vpop.permute.xlu0 %1012
    %1015 = vset.pattern.permute.xlu0 33
    %1016 = vperm.xlu0 %1015, %v921
    %v1017 = vpop.permute.xlu0 %1016
    %v1019 = vperm.slane %v971, 0
    %v1020 = vadd.f32 %v989, %v1019
    %v1021 = vadd.f32 %v993, %v1019
    %v1022 = vadd.f32 %v997, %v1019
    %v1023 = vadd.f32 %v1001, %v1019
    %v1024 = vadd.f32 %v1005, %v1019
    %v1025 = vadd.f32 %v1009, %v1019
    %v1026 = vadd.f32 %v1013, %v1019
    %v1027 = vadd.f32 %v1017, %v1019
    %v1028 = vmul.f32 %v1020, 0.2
    %v1029 = vmul.f32 %v1021, 0.2
    %v1030 = vmul.f32 %v1022, 0.2
    %v1031 = vmul.f32 %v1023, 0.2
    %v1032 = vmul.f32 %v1024, 0.2
    %v1033 = vmul.f32 %v1025, 0.2
    %v1034 = vmul.f32 %v1026, 0.2
    %v1035 = vmul.f32 %v1027, 0.2
    %v1036 = vmax.f32 %v1020, %v1028
    %v1037 = vmax.f32 %v1021, %v1029
    %v1038 = vmax.f32 %v1022, %v1030
    %v1039 = vmax.f32 %v1023, %v1031
    %v1040 = vmax.f32 %v1024, %v1032
    %v1041 = vmax.f32 %v1025, %v1033
    %v1042 = vmax.f32 %v1026, %v1034
    %v1043 = vmax.f32 %v1027, %v1035
    %v1044 = vadd.f32 %v1036, %v78
    %v1045 = vadd.f32 %v1037, %v79
    %v1046 = vadd.f32 %v1038, %v80
    %v1047 = vadd.f32 %v1039, %v81
    %v1048 = vadd.f32 %v1040, %v82
    %v1049 = vadd.f32 %v1041, %v83
    %v1050 = vadd.f32 %v1042, %v84
    %v1051 = vadd.f32 %v1043, %v85
    %v1052 = vsel %vm289, %v1044, -inf
    %1053 = vmax.xlane.f32.xlu0 %v1052
    %v1054 = vpop.xlane.xlu0 %1053
    %v1055 = vsel %vm289, %v1045, -inf
    %1056 = vmax.xlane.f32.xlu0 %v1055
    %v1057 = vpop.xlane.xlu0 %1056
    %v1058 = vsel %vm289, %v1046, -inf
    %1059 = vmax.xlane.f32.xlu0 %v1058
    %v1060 = vpop.xlane.xlu0 %1059
    %v1061 = vsel %vm289, %v1047, -inf
    %1062 = vmax.xlane.f32.xlu0 %v1061
    %v1063 = vpop.xlane.xlu0 %1062
    %v1064 = vsel %vm289, %v1048, -inf
    %1065 = vmax.xlane.f32.xlu0 %v1064
    %v1066 = vpop.xlane.xlu0 %1065
    %v1067 = vsel %vm289, %v1049, -inf
    %1068 = vmax.xlane.f32.xlu0 %v1067
    %v1069 = vpop.xlane.xlu0 %1068
    %v1070 = vsel %vm289, %v1050, -inf
    %1071 = vmax.xlane.f32.xlu0 %v1070
    %v1072 = vpop.xlane.xlu0 %1071
    %v1073 = vsel %vm289, %v1051, -inf
    %1074 = vmax.xlane.f32.xlu0 %v1073
    %v1075 = vpop.xlane.xlu0 %1074
    %v1076 = vsub.f32 %v1044, %v1054
    %v1077 = vsub.f32 %v1045, %v1057
    %v1078 = vsub.f32 %v1046, %v1060
    %v1079 = vsub.f32 %v1047, %v1063
    %v1080 = vsub.f32 %v1048, %v1066
    %v1081 = vsub.f32 %v1049, %v1069
    %v1082 = vsub.f32 %v1050, %v1072
    %v1083 = vsub.f32 %v1051, %v1075
    %v1084 = vmul.f32 %v1076, 1.442695
    %v1085 = vpow.pop %v1084
    %v1086 = vmul.f32 %v1077, 1.442695
    %v1087 = vpow.pop %v1086
    %v1088 = vmul.f32 %v1078, 1.442695
    %v1089 = vpow.pop %v1088
    %v1090 = vmul.f32 %v1079, 1.442695
    %v1091 = vpow.pop %v1090
    %v1092 = vmul.f32 %v1080, 1.442695
    %v1093 = vpow.pop %v1092
    %v1094 = vmul.f32 %v1081, 1.442695
    %v1095 = vpow.pop %v1094
    %v1096 = vmul.f32 %v1082, 1.442695
    %v1097 = vpow.pop %v1096
    %v1098 = vmul.f32 %v1083, 1.442695
    %v1099 = vpow.pop %v1098
    %v1101 = vsel %vm289, %v1085, 0
    %v1104 = vsel %vm289, %v1087, 0
    %v1107 = vsel %vm289, %v1089, 0
    %v1110 = vsel %vm289, %v1091, 0
    %v1113 = vsel %vm289, %v1093, 0
    %v1116 = vsel %vm289, %v1095, 0
    %v1119 = vsel %vm289, %v1097, 0
    %v1122 = vsel %vm289, %v1099, 0
    %1124 = vmatpush.msra.mxu0 0.0
    %1125 = vmatpush.msra.mxu0 0.0
    %1126 = vmatpush.msra.mxu0 0.0
    %1127 = vmatpush.msra.mxu0 0.0
    %1128 = vmatpush.msra.mxu0 0.0
    %1129 = vmatpush.msra.mxu0 0.0
    %1130 = vmatpush.msra.mxu0 0.0
    %1131 = vmatpush.msra.mxu0 0.0
    %1132 = vmatpush.msra.mxu0 %v921
    %1133 = vmatpush.msra.mxu0 %v918
    %1134 = vmatpush.msra.mxu0 %v915
    %1135 = vmatpush.msra.mxu0 %v912
    %1136 = vmatpush.msra.mxu0 %v909
    %1137 = vmatpush.msra.mxu0 %v906
    %1138 = vmatpush.msra.mxu0 %v903
    %1139 = vmatpush.msra.mxu0 %v900
    %1140 = vmatmul.f32.gmra.mxu0 %v1101
    %v1141 = vpop.f32.mrf.mxu0
    %v1142 = vadd.f32 0.0, %v1141
    %1143 = vmatmul.f32.gmra.mxu0 %v1104
    %v1144 = vpop.f32.mrf.mxu0
    %v1145 = vadd.f32 0.0, %v1144
    %1146 = vmatmul.f32.gmra.mxu0 %v1107
    %v1147 = vpop.f32.mrf.mxu0
    %v1148 = vadd.f32 0.0, %v1147
    %1149 = vmatmul.f32.gmra.mxu0 %v1110
    %v1150 = vpop.f32.mrf.mxu0
    %v1151 = vadd.f32 0.0, %v1150
    %1152 = vmatmul.f32.gmra.mxu0 %v1113
    %v1153 = vpop.f32.mrf.mxu0
    %v1154 = vadd.f32 0.0, %v1153
    %1155 = vmatmul.f32.gmra.mxu0 %v1116
    %v1156 = vpop.f32.mrf.mxu0
    %v1157 = vadd.f32 0.0, %v1156
    %1158 = vmatmul.f32.gmra.mxu0 %v1119
    %v1159 = vpop.f32.mrf.mxu0
    %v1160 = vadd.f32 0.0, %v1159
    %1161 = vmatmul.f32.gmra.mxu0 %v1122
    %v1162 = vpop.f32.mrf.mxu0
    %v1163 = vadd.f32 0.0, %v1162
    %1164 = vdwg.mxu0
    %v1165 = vrcp.pop %v1142
    %v1166 = vrcp.pop %v1145
    %v1167 = vrcp.pop %v1148
    %v1168 = vrcp.pop %v1151
    %v1169 = vrcp.pop %v1154
    %v1170 = vrcp.pop %v1157
    %v1171 = vrcp.pop %v1160
    %v1172 = vrcp.pop %v1163
    %1174 = vset.pattern.permute.xlu0 32
    %1175 = vperm.xlu0 %1174, %v1165
    %v1176 = vpop.permute.xlu0 %1175
    %1179 = vset.pattern.permute.xlu0 32
    %1180 = vperm.xlu0 %1179, %v1166
    %v1181 = vpop.permute.xlu0 %1180
    %1184 = vset.pattern.permute.xlu0 32
    %1185 = vperm.xlu0 %1184, %v1167
    %v1186 = vpop.permute.xlu0 %1185
    %1189 = vset.pattern.permute.xlu0 32
    %1190 = vperm.xlu0 %1189, %v1168
    %v1191 = vpop.permute.xlu0 %1190
    %1194 = vset.pattern.permute.xlu0 32
    %1195 = vperm.xlu0 %1194, %v1169
    %v1196 = vpop.permute.xlu0 %1195
    %1199 = vset.pattern.permute.xlu0 32
    %1200 = vperm.xlu0 %1199, %v1170
    %v1201 = vpop.permute.xlu0 %1200
    %1204 = vset.pattern.permute.xlu0 32
    %1205 = vperm.xlu0 %1204, %v1171
    %v1206 = vpop.permute.xlu0 %1205
    %1209 = vset.pattern.permute.xlu0 32
    %1210 = vperm.xlu0 %1209, %v1172
    %v1211 = vpop.permute.xlu0 %1210
    %v1213 = vmul.f32 %v1142, %v1176
    %v1214 = vmul.f32 %v1145, %v1181
    %v1215 = vmul.f32 %v1148, %v1186
    %v1216 = vmul.f32 %v1151, %v1191
    %v1217 = vmul.f32 %v1154, %v1196
    %v1218 = vmul.f32 %v1157, %v1201
    %v1219 = vmul.f32 %v1160, %v1206
    %v1220 = vmul.f32 %v1163, %v1211
    %v1221 = vmax.f32 %v1213, 0.0
    %v1222 = vmax.f32 %v1214, 0.0
    %v1223 = vmax.f32 %v1215, 0.0
    %v1224 = vmax.f32 %v1216, 0.0
    %v1225 = vmax.f32 %v1217, 0.0
    %v1226 = vmax.f32 %v1218, 0.0
    %v1227 = vmax.f32 %v1219, 0.0
    %v1228 = vmax.f32 %v1220, 0.0
    %s1229 = scalar_lea.vmem [#allocation2], 96
    %v1230 = vld [vmem:[%s1229] sm:$0xff]
    %v1231 = vld [vmem:[%s1229 + $0x8] sm:$0xff]
    %v1232 = vld [vmem:[%s1229 + $0x10] sm:$0xff]
    %v1233 = vld [vmem:[%s1229 + $0x18] sm:$0xff]
    %s1234 = scalar_lea.vmem [#allocation5], 3
    %v1235 = vld [vmem:[%s1234] sm:$0x1]
    %v1237 = vperm.slane %v1235, 0
    %v1240 = vsel %vm94, %v1221, 0
    %v1243 = vsel %vm94, %v1222, 0
    %v1246 = vsel %vm94, %v1223, 0
    %v1249 = vsel %vm94, %v1224, 0
    %v1252 = vsel %vm94, %v1225, 0
    %v1255 = vsel %vm94, %v1226, 0
    %v1258 = vsel %vm94, %v1227, 0
    %v1261 = vsel %vm94, %v1228, 0
    %1263 = vmatpush.msra.mxu0 0.0
    %1264 = vmatpush.msra.mxu0 0.0
    %1265 = vmatpush.msra.mxu0 0.0
    %1266 = vmatpush.msra.mxu0 0.0
    %1267 = vmatpush.msra.mxu0 0.0
    %1268 = vmatpush.msra.mxu0 0.0
    %1269 = vmatpush.msra.mxu0 0.0
    %1270 = vmatpush.msra.mxu0 0.0
    %1271 = vmatpush.msra.mxu0 0.0
    %1272 = vmatpush.msra.mxu0 0.0
    %1273 = vmatpush.msra.mxu0 0.0
    %1274 = vmatpush.msra.mxu0 0.0
    %1275 = vmatpush.msra.mxu0 %v1233
    %1276 = vmatpush.msra.mxu0 %v1232
    %1277 = vmatpush.msra.mxu0 %v1231
    %1278 = vmatpush.msra.mxu0 %v1230
    %1279 = vmatmul.f32.gmra.mxu0 %v1240
    %v1280 = vpop.f32.mrf.mxu0
    %v1281 = vadd.f32 %v1237, %v1280
    %1282 = vmatmul.f32.gmra.mxu0 %v1243
    %v1283 = vpop.f32.mrf.mxu0
    %v1284 = vadd.f32 %v1237, %v1283
    %1285 = vmatmul.f32.gmra.mxu0 %v1246
    %v1286 = vpop.f32.mrf.mxu0
    %v1287 = vadd.f32 %v1237, %v1286
    %1288 = vmatmul.f32.gmra.mxu0 %v1249
    %v1289 = vpop.f32.mrf.mxu0
    %v1290 = vadd.f32 %v1237, %v1289
    %1291 = vmatmul.f32.gmra.mxu0 %v1252
    %v1292 = vpop.f32.mrf.mxu0
    %v1293 = vadd.f32 %v1237, %v1292
    %1294 = vmatmul.f32.gmra.mxu0 %v1255
    %v1295 = vpop.f32.mrf.mxu0
    %v1296 = vadd.f32 %v1237, %v1295
    %1297 = vmatmul.f32.gmra.mxu0 %v1258
    %v1298 = vpop.f32.mrf.mxu0
    %v1299 = vadd.f32 %v1237, %v1298
    %1300 = vmatmul.f32.gmra.mxu0 %v1261
    %v1301 = vpop.f32.mrf.mxu0
    %v1302 = vadd.f32 %v1237, %v1301
    %1303 = vdwg.mxu0
    %1312 = vrot.lane.b32.xlu0 %v1281, 94
    %v1313 = vpop.permute.xlu0 %1312
    %1314 = vrot.lane.b32.xlu0 %v1284, 94
    %v1315 = vpop.permute.xlu0 %1314
    %1316 = vrot.lane.b32.xlu0 %v1287, 94
    %v1317 = vpop.permute.xlu0 %1316
    %1318 = vrot.lane.b32.xlu0 %v1290, 94
    %v1319 = vpop.permute.xlu0 %1318
    %1320 = vrot.lane.b32.xlu0 %v1293, 94
    %v1321 = vpop.permute.xlu0 %1320
    %1322 = vrot.lane.b32.xlu0 %v1296, 94
    %v1323 = vpop.permute.xlu0 %1322
    %1324 = vrot.lane.b32.xlu0 %v1299, 94
    %v1325 = vpop.permute.xlu0 %1324
    %1326 = vrot.lane.b32.xlu0 %v1302, 94
    %v1327 = vpop.permute.xlu0 %1326
    %1336 = vxpose.xlu0.b32.start [1/16] %v1313, 128
    %1337 = vxpose.xlu0.b32.cont [2/16] %v1315, 128
    %1338 = vxpose.xlu0.b32.cont [3/16] %v1317, 128
    %1339 = vxpose.xlu0.b32.cont [4/16] %v1319, 128
    %1340 = vxpose.xlu0.b32.cont [5/16] %v1321, 128
    %1341 = vxpose.xlu0.b32.cont [6/16] %v1323, 128
    %1342 = vxpose.xlu0.b32.cont [7/16] %v1325, 128
    %1343 = vxpose.xlu0.b32.cont [8/16] %v1327, 128
    %1344 = vxpose.xlu0.b32.cont [9/16] 0.0, 128
    %1345 = vxpose.xlu0.b32.cont [10/16] 0.0, 128
    %1346 = vxpose.xlu0.b32.cont [11/16] 0.0, 128
    %1347 = vxpose.xlu0.b32.cont [12/16] 0.0, 128
    %1348 = vxpose.xlu0.b32.cont [13/16] 0.0, 128
    %1349 = vxpose.xlu0.b32.cont [14/16] 0.0, 128
    %1350 = vxpose.xlu0.b32.cont [15/16] 0.0, 128
    %1351 = vxpose.xlu0.b32.end [16/16] 0.0, 128
    %v1352 = vpop.trf.xlu0
    %v1353 = vpop.trf.xlu0
    %v1354 = vpop.trf.xlu0
    %v1355 = vpop.trf.xlu0
    %v1356 = vpop.trf.xlu0
    %v1357 = vpop.trf.xlu0
    %v1358 = vpop.trf.xlu0
    %v1359 = vpop.trf.xlu0
    %v1360 = vpop.trf.xlu0
    %v1361 = vpop.trf.xlu0
    %v1362 = vpop.trf.xlu0
    %v1363 = vpop.trf.xlu0
    %v1364 = vpop.trf.xlu0
    %v1365 = vpop.trf.xlu0
    %v1366 = vpop.trf.xlu0
    %v1367 = vpop.trf.xlu0
    %1368 = vset.pattern.permute.xlu0 33
    %1369 = vperm.xlu0 %1368, %v1281
    %v1370 = vpop.permute.xlu0 %1369
    %1372 = vset.pattern.permute.xlu0 33
    %1373 = vperm.xlu0 %1372, %v1284
    %v1374 = vpop.permute.xlu0 %1373
    %1376 = vset.pattern.permute.xlu0 33
    %1377 = vperm.xlu0 %1376, %v1287
    %v1378 = vpop.permute.xlu0 %1377
    %1380 = vset.pattern.permute.xlu0 33
    %1381 = vperm.xlu0 %1380, %v1290
    %v1382 = vpop.permute.xlu0 %1381
    %1384 = vset.pattern.permute.xlu0 33
    %1385 = vperm.xlu0 %1384, %v1293
    %v1386 = vpop.permute.xlu0 %1385
    %1388 = vset.pattern.permute.xlu0 33
    %1389 = vperm.xlu0 %1388, %v1296
    %v1390 = vpop.permute.xlu0 %1389
    %1392 = vset.pattern.permute.xlu0 33
    %1393 = vperm.xlu0 %1392, %v1299
    %v1394 = vpop.permute.xlu0 %1393
    %1396 = vset.pattern.permute.xlu0 33
    %1397 = vperm.xlu0 %1396, %v1302
    %v1398 = vpop.permute.xlu0 %1397
    %v1400 = vperm.slane %v1352, 0
    %v1401 = vadd.f32 %v1370, %v1400
    %v1402 = vadd.f32 %v1374, %v1400
    %v1403 = vadd.f32 %v1378, %v1400
    %v1404 = vadd.f32 %v1382, %v1400
    %v1405 = vadd.f32 %v1386, %v1400
    %v1406 = vadd.f32 %v1390, %v1400
    %v1407 = vadd.f32 %v1394, %v1400
    %v1408 = vadd.f32 %v1398, %v1400
    %v1409 = vmul.f32 %v1401, 0.2
    %v1410 = vmul.f32 %v1402, 0.2
    %v1411 = vmul.f32 %v1403, 0.2
    %v1412 = vmul.f32 %v1404, 0.2
    %v1413 = vmul.f32 %v1405, 0.2
    %v1414 = vmul.f32 %v1406, 0.2
    %v1415 = vmul.f32 %v1407, 0.2
    %v1416 = vmul.f32 %v1408, 0.2
    %v1417 = vmax.f32 %v1401, %v1409
    %v1418 = vmax.f32 %v1402, %v1410
    %v1419 = vmax.f32 %v1403, %v1411
    %v1420 = vmax.f32 %v1404, %v1412
    %v1421 = vmax.f32 %v1405, %v1413
    %v1422 = vmax.f32 %v1406, %v1414
    %v1423 = vmax.f32 %v1407, %v1415
    %v1424 = vmax.f32 %v1408, %v1416
    %v1425 = vadd.f32 %v1417, %v78
    %v1426 = vadd.f32 %v1418, %v79
    %v1427 = vadd.f32 %v1419, %v80
    %v1428 = vadd.f32 %v1420, %v81
    %v1429 = vadd.f32 %v1421, %v82
    %v1430 = vadd.f32 %v1422, %v83
    %v1431 = vadd.f32 %v1423, %v84
    %v1432 = vadd.f32 %v1424, %v85
    %v1433 = vsel %vm289, %v1425, -inf
    %1434 = vmax.xlane.f32.xlu0 %v1433
    %v1435 = vpop.xlane.xlu0 %1434
    %v1436 = vsel %vm289, %v1426, -inf
    %1437 = vmax.xlane.f32.xlu0 %v1436
    %v1438 = vpop.xlane.xlu0 %1437
    %v1439 = vsel %vm289, %v1427, -inf
    %1440 = vmax.xlane.f32.xlu0 %v1439
    %v1441 = vpop.xlane.xlu0 %1440
    %v1442 = vsel %vm289, %v1428, -inf
    %1443 = vmax.xlane.f32.xlu0 %v1442
    %v1444 = vpop.xlane.xlu0 %1443
    %v1445 = vsel %vm289, %v1429, -inf
    %1446 = vmax.xlane.f32.xlu0 %v1445
    %v1447 = vpop.xlane.xlu0 %1446
    %v1448 = vsel %vm289, %v1430, -inf
    %1449 = vmax.xlane.f32.xlu0 %v1448
    %v1450 = vpop.xlane.xlu0 %1449
    %v1451 = vsel %vm289, %v1431, -inf
    %1452 = vmax.xlane.f32.xlu0 %v1451
    %v1453 = vpop.xlane.xlu0 %1452
    %v1454 = vsel %vm289, %v1432, -inf
    %1455 = vmax.xlane.f32.xlu0 %v1454
    %v1456 = vpop.xlane.xlu0 %1455
    %v1457 = vsub.f32 %v1425, %v1435
    %v1458 = vsub.f32 %v1426, %v1438
    %v1459 = vsub.f32 %v1427, %v1441
    %v1460 = vsub.f32 %v1428, %v1444
    %v1461 = vsub.f32 %v1429, %v1447
    %v1462 = vsub.f32 %v1430, %v1450
    %v1463 = vsub.f32 %v1431, %v1453
    %v1464 = vsub.f32 %v1432, %v1456
    %v1465 = vmul.f32 %v1457, 1.442695
    %v1466 = vpow.pop %v1465
    %v1467 = vmul.f32 %v1458, 1.442695
    %v1468 = vpow.pop %v1467
    %v1469 = vmul.f32 %v1459, 1.442695
    %v1470 = vpow.pop %v1469
    %v1471 = vmul.f32 %v1460, 1.442695
    %v1472 = vpow.pop %v1471
    %v1473 = vmul.f32 %v1461, 1.442695
    %v1474 = vpow.pop %v1473
    %v1475 = vmul.f32 %v1462, 1.442695
    %v1476 = vpow.pop %v1475
    %v1477 = vmul.f32 %v1463, 1.442695
    %v1478 = vpow.pop %v1477
    %v1479 = vmul.f32 %v1464, 1.442695
    %v1480 = vpow.pop %v1479
    %v1482 = vsel %vm289, %v1466, 0
    %v1485 = vsel %vm289, %v1468, 0
    %v1488 = vsel %vm289, %v1470, 0
    %v1491 = vsel %vm289, %v1472, 0
    %v1494 = vsel %vm289, %v1474, 0
    %v1497 = vsel %vm289, %v1476, 0
    %v1500 = vsel %vm289, %v1478, 0
    %v1503 = vsel %vm289, %v1480, 0
    %1505 = vmatpush.msra.mxu0 0.0
    %1506 = vmatpush.msra.mxu0 0.0
    %1507 = vmatpush.msra.mxu0 0.0
    %1508 = vmatpush.msra.mxu0 0.0
    %1509 = vmatpush.msra.mxu0 0.0
    %1510 = vmatpush.msra.mxu0 0.0
    %1511 = vmatpush.msra.mxu0 0.0
    %1512 = vmatpush.msra.mxu0 0.0
    %1513 = vmatpush.msra.mxu0 %v1302
    %1514 = vmatpush.msra.mxu0 %v1299
    %1515 = vmatpush.msra.mxu0 %v1296
    %1516 = vmatpush.msra.mxu0 %v1293
    %1517 = vmatpush.msra.mxu0 %v1290
    %1518 = vmatpush.msra.mxu0 %v1287
    %1519 = vmatpush.msra.mxu0 %v1284
    %1520 = vmatpush.msra.mxu0 %v1281
    %1521 = vmatmul.f32.gmra.mxu0 %v1482
    %v1522 = vpop.f32.mrf.mxu0
    %v1523 = vadd.f32 0.0, %v1522
    %1524 = vmatmul.f32.gmra.mxu0 %v1485
    %v1525 = vpop.f32.mrf.mxu0
    %v1526 = vadd.f32 0.0, %v1525
    %1527 = vmatmul.f32.gmra.mxu0 %v1488
    %v1528 = vpop.f32.mrf.mxu0
    %v1529 = vadd.f32 0.0, %v1528
    %1530 = vmatmul.f32.gmra.mxu0 %v1491
    %v1531 = vpop.f32.mrf.mxu0
    %v1532 = vadd.f32 0.0, %v1531
    %1533 = vmatmul.f32.gmra.mxu0 %v1494
    %v1534 = vpop.f32.mrf.mxu0
    %v1535 = vadd.f32 0.0, %v1534
    %1536 = vmatmul.f32.gmra.mxu0 %v1497
    %v1537 = vpop.f32.mrf.mxu0
    %v1538 = vadd.f32 0.0, %v1537
    %1539 = vmatmul.f32.gmra.mxu0 %v1500
    %v1540 = vpop.f32.mrf.mxu0
    %v1541 = vadd.f32 0.0, %v1540
    %1542 = vmatmul.f32.gmra.mxu0 %v1503
    %v1543 = vpop.f32.mrf.mxu0
    %v1544 = vadd.f32 0.0, %v1543
    %1545 = vdwg.mxu0
    %v1546 = vrcp.pop %v1523
    %v1547 = vrcp.pop %v1526
    %v1548 = vrcp.pop %v1529
    %v1549 = vrcp.pop %v1532
    %v1550 = vrcp.pop %v1535
    %v1551 = vrcp.pop %v1538
    %v1552 = vrcp.pop %v1541
    %v1553 = vrcp.pop %v1544
    %1555 = vset.pattern.permute.xlu0 32
    %1556 = vperm.xlu0 %1555, %v1546
    %v1557 = vpop.permute.xlu0 %1556
    %1560 = vset.pattern.permute.xlu0 32
    %1561 = vperm.xlu0 %1560, %v1547
    %v1562 = vpop.permute.xlu0 %1561
    %1565 = vset.pattern.permute.xlu0 32
    %1566 = vperm.xlu0 %1565, %v1548
    %v1567 = vpop.permute.xlu0 %1566
    %1570 = vset.pattern.permute.xlu0 32
    %1571 = vperm.xlu0 %1570, %v1549
    %v1572 = vpop.permute.xlu0 %1571
    %1575 = vset.pattern.permute.xlu0 32
    %1576 = vperm.xlu0 %1575, %v1550
    %v1577 = vpop.permute.xlu0 %1576
    %1580 = vset.pattern.permute.xlu0 32
    %1581 = vperm.xlu0 %1580, %v1551
    %v1582 = vpop.permute.xlu0 %1581
    %1585 = vset.pattern.permute.xlu0 32
    %1586 = vperm.xlu0 %1585, %v1552
    %v1587 = vpop.permute.xlu0 %1586
    %1590 = vset.pattern.permute.xlu0 32
    %1591 = vperm.xlu0 %1590, %v1553
    %v1592 = vpop.permute.xlu0 %1591
    %v1594 = vmul.f32 %v1523, %v1557
    %v1595 = vmul.f32 %v1526, %v1562
    %v1596 = vmul.f32 %v1529, %v1567
    %v1597 = vmul.f32 %v1532, %v1572
    %v1598 = vmul.f32 %v1535, %v1577
    %v1599 = vmul.f32 %v1538, %v1582
    %v1600 = vmul.f32 %v1541, %v1587
    %v1601 = vmul.f32 %v1544, %v1592
    %v1602 = vmax.f32 %v1594, 0.0
    %v1603 = vmax.f32 %v1595, 0.0
    %v1604 = vmax.f32 %v1596, 0.0
    %v1605 = vmax.f32 %v1597, 0.0
    %v1606 = vmax.f32 %v1598, 0.0
    %v1607 = vmax.f32 %v1599, 0.0
    %v1608 = vmax.f32 %v1600, 0.0
    %v1609 = vmax.f32 %v1601, 0.0
    %v1610 = vld [vmem:[%s4] sm:$0xff]
    %v1611 = vld [vmem:[%s4 + $0x8] sm:$0xff]
    %v1612 = vld [vmem:[%s4 + $0x10] sm:$0xff]
    %v1613 = vld [vmem:[%s4 + $0x18] sm:$0xff]
    %v1614 = vld [vmem:[%s5] sm:$0x1]
    %v1616 = vperm.slane %v1614, 0
    %v1619 = vsel %vm94, %v1602, 0
    %v1622 = vsel %vm94, %v1603, 0
    %v1625 = vsel %vm94, %v1604, 0
    %v1628 = vsel %vm94, %v1605, 0
    %v1631 = vsel %vm94, %v1606, 0
    %v1634 = vsel %vm94, %v1607, 0
    %v1637 = vsel %vm94, %v1608, 0
    %v1640 = vsel %vm94, %v1609, 0
    %1642 = vmatpush.msra.mxu0 0.0
    %1643 = vmatpush.msra.mxu0 0.0
    %1644 = vmatpush.msra.mxu0 0.0
    %1645 = vmatpush.msra.mxu0 0.0
    %1646 = vmatpush.msra.mxu0 0.0
    %1647 = vmatpush.msra.mxu0 0.0
    %1648 = vmatpush.msra.mxu0 0.0
    %1649 = vmatpush.msra.mxu0 0.0
    %1650 = vmatpush.msra.mxu0 0.0
    %1651 = vmatpush.msra.mxu0 0.0
    %1652 = vmatpush.msra.mxu0 0.0
    %1653 = vmatpush.msra.mxu0 0.0
    %1654 = vmatpush.msra.mxu0 %v1613
    %1655 = vmatpush.msra.mxu0 %v1612
    %1656 = vmatpush.msra.mxu0 %v1611
    %1657 = vmatpush.msra.mxu0 %v1610
    %1658 = vmatmul.f32.gmra.mxu0 %v1619
    %v1659 = vpop.f32.mrf.mxu0
    %v1660 = vadd.f32 %v1616, %v1659
    %1661 = vmatmul.f32.gmra.mxu0 %v1622
    %v1662 = vpop.f32.mrf.mxu0
    %v1663 = vadd.f32 %v1616, %v1662
    %1664 = vmatmul.f32.gmra.mxu0 %v1625
    %v1665 = vpop.f32.mrf.mxu0
    %v1666 = vadd.f32 %v1616, %v1665
    %1667 = vmatmul.f32.gmra.mxu0 %v1628
    %v1668 = vpop.f32.mrf.mxu0
    %v1669 = vadd.f32 %v1616, %v1668
    %1670 = vmatmul.f32.gmra.mxu0 %v1631
    %v1671 = vpop.f32.mrf.mxu0
    %v1672 = vadd.f32 %v1616, %v1671
    %1673 = vmatmul.f32.gmra.mxu0 %v1634
    %v1674 = vpop.f32.mrf.mxu0
    %v1675 = vadd.f32 %v1616, %v1674
    %1676 = vmatmul.f32.gmra.mxu0 %v1637
    %v1677 = vpop.f32.mrf.mxu0
    %v1678 = vadd.f32 %v1616, %v1677
    %1679 = vmatmul.f32.gmra.mxu0 %v1640
    %v1680 = vpop.f32.mrf.mxu0
    %v1681 = vadd.f32 %v1616, %v1680
    %1682 = vdwg.mxu0
    %v1683 = vmax.f32 %v1660, 0.0
    %v1684 = vmax.f32 %v1663, 0.0
    %v1685 = vmax.f32 %v1666, 0.0
    %v1686 = vmax.f32 %v1669, 0.0
    %v1687 = vmax.f32 %v1672, 0.0
    %v1688 = vmax.f32 %v1675, 0.0
    %v1689 = vmax.f32 %v1678, 0.0
    %v1690 = vmax.f32 %v1681, 0.0
    %v1691 = vld [vmem:[%s6] sm:$0xff]
    %v1692 = vld [vmem:[%s6 + $0x8] sm:$0xff]
    %v1693 = vld [vmem:[%s6 + $0x10] sm:$0xff]
    %v1694 = vld [vmem:[%s6 + $0x18] sm:$0xff]
    %v1695 = vld [vmem:[%s7] sm:$0x1]
    %v1697 = vperm.slane %v1695, 0
    %v1700 = vsel %vm94, %v1683, 0
    %v1703 = vsel %vm94, %v1684, 0
    %v1706 = vsel %vm94, %v1685, 0
    %v1709 = vsel %vm94, %v1686, 0
    %v1712 = vsel %vm94, %v1687, 0
    %v1715 = vsel %vm94, %v1688, 0
    %v1718 = vsel %vm94, %v1689, 0
    %v1721 = vsel %vm94, %v1690, 0
    %1723 = vmatpush.msra.mxu0 0.0
    %1724 = vmatpush.msra.mxu0 0.0
    %1725 = vmatpush.msra.mxu0 0.0
    %1726 = vmatpush.msra.mxu0 0.0
    %1727 = vmatpush.msra.mxu0 0.0
    %1728 = vmatpush.msra.mxu0 0.0
    %1729 = vmatpush.msra.mxu0 0.0
    %1730 = vmatpush.msra.mxu0 0.0
    %1731 = vmatpush.msra.mxu0 0.0
    %1732 = vmatpush.msra.mxu0 0.0
    %1733 = vmatpush.msra.mxu0 0.0
    %1734 = vmatpush.msra.mxu0 0.0
    %1735 = vmatpush.msra.mxu0 %v1694
    %1736 = vmatpush.msra.mxu0 %v1693
    %1737 = vmatpush.msra.mxu0 %v1692
    %1738 = vmatpush.msra.mxu0 %v1691
    %1739 = vmatmul.f32.gmra.mxu0 %v1700
    %v1740 = vpop.f32.mrf.mxu0
    %v1741 = vadd.f32 %v1697, %v1740
    %1742 = vmatmul.f32.gmra.mxu0 %v1703
    %v1743 = vpop.f32.mrf.mxu0
    %v1744 = vadd.f32 %v1697, %v1743
    %1745 = vmatmul.f32.gmra.mxu0 %v1706
    %v1746 = vpop.f32.mrf.mxu0
    %v1747 = vadd.f32 %v1697, %v1746
    %1748 = vmatmul.f32.gmra.mxu0 %v1709
    %v1749 = vpop.f32.mrf.mxu0
    %v1750 = vadd.f32 %v1697, %v1749
    %1751 = vmatmul.f32.gmra.mxu0 %v1712
    %v1752 = vpop.f32.mrf.mxu0
    %v1753 = vadd.f32 %v1697, %v1752
    %1754 = vmatmul.f32.gmra.mxu0 %v1715
    %v1755 = vpop.f32.mrf.mxu0
    %v1756 = vadd.f32 %v1697, %v1755
    %1757 = vmatmul.f32.gmra.mxu0 %v1718
    %v1758 = vpop.f32.mrf.mxu0
    %v1759 = vadd.f32 %v1697, %v1758
    %1760 = vmatmul.f32.gmra.mxu0 %v1721
    %v1761 = vpop.f32.mrf.mxu0
    %v1762 = vadd.f32 %v1697, %v1761
    %1763 = vdwg.mxu0
    %1764 = vmax.xlane.f32.xlu0 %v1741
    %v1765 = vpop.xlane.xlu0 %1764
    %1766 = vmax.xlane.f32.xlu0 %v1744
    %v1767 = vpop.xlane.xlu0 %1766
    %1768 = vmax.xlane.f32.xlu0 %v1747
    %v1769 = vpop.xlane.xlu0 %1768
    %1770 = vmax.xlane.f32.xlu0 %v1750
    %v1771 = vpop.xlane.xlu0 %1770
    %1772 = vmax.xlane.f32.xlu0 %v1753
    %v1773 = vpop.xlane.xlu0 %1772
    %1774 = vmax.xlane.f32.xlu0 %v1756
    %v1775 = vpop.xlane.xlu0 %1774
    %1776 = vmax.xlane.f32.xlu0 %v1759
    %v1777 = vpop.xlane.xlu0 %1776
    %1778 = vmax.xlane.f32.xlu0 %v1762
    %v1779 = vpop.xlane.xlu0 %1778
    %v1780 = vsub.f32 %v1741, %v1765
    %v1781 = vsub.f32 %v1744, %v1767
    %v1782 = vsub.f32 %v1747, %v1769
    %v1783 = vsub.f32 %v1750, %v1771
    %v1784 = vsub.f32 %v1753, %v1773
    %v1785 = vsub.f32 %v1756, %v1775
    %v1786 = vsub.f32 %v1759, %v1777
    %v1787 = vsub.f32 %v1762, %v1779
    %v1788 = vmul.f32 %v1780, 1.442695
    %v1789 = vpow.pop %v1788
    %v1790 = vmul.f32 %v1781, 1.442695
    %v1791 = vpow.pop %v1790
    %v1792 = vmul.f32 %v1782, 1.442695
    %v1793 = vpow.pop %v1792
    %v1794 = vmul.f32 %v1783, 1.442695
    %v1795 = vpow.pop %v1794
    %v1796 = vmul.f32 %v1784, 1.442695
    %v1797 = vpow.pop %v1796
    %v1798 = vmul.f32 %v1785, 1.442695
    %v1799 = vpow.pop %v1798
    %v1800 = vmul.f32 %v1786, 1.442695
    %v1801 = vpow.pop %v1800
    %v1802 = vmul.f32 %v1787, 1.442695
    %v1803 = vpow.pop %v1802
    %1804 = vadd.xlane.f32.xlu0 %v1789
    %v1805 = vpop.xlane.xlu0 %1804
    %1806 = vadd.xlane.f32.xlu0 %v1791
    %v1807 = vpop.xlane.xlu0 %1806
    %1808 = vadd.xlane.f32.xlu0 %v1793
    %v1809 = vpop.xlane.xlu0 %1808
    %1810 = vadd.xlane.f32.xlu0 %v1795
    %v1811 = vpop.xlane.xlu0 %1810
    %1812 = vadd.xlane.f32.xlu0 %v1797
    %v1813 = vpop.xlane.xlu0 %1812
    %1814 = vadd.xlane.f32.xlu0 %v1799
    %v1815 = vpop.xlane.xlu0 %1814
    %1816 = vadd.xlane.f32.xlu0 %v1801
    %v1817 = vpop.xlane.xlu0 %1816
    %1818 = vadd.xlane.f32.xlu0 %v1803
    %v1819 = vpop.xlane.xlu0 %1818
    %v1820 = vlog2.pop %v1805
    %v1821 = vmul.f32 %v1820, 0.6931472
    %v1822 = vlog2.pop %v1807
    %v1823 = vmul.f32 %v1822, 0.6931472
    %v1824 = vlog2.pop %v1809
    %v1825 = vmul.f32 %v1824, 0.6931472
    %v1826 = vlog2.pop %v1811
    %v1827 = vmul.f32 %v1826, 0.6931472
    %v1828 = vlog2.pop %v1813
    %v1829 = vmul.f32 %v1828, 0.6931472
    %v1830 = vlog2.pop %v1815
    %v1831 = vmul.f32 %v1830, 0.6931472
    %v1832 = vlog2.pop %v1817
    %v1833 = vmul.f32 %v1832, 0.6931472
    %v1834 = vlog2.pop %v1819
    %v1835 = vmul.f32 %v1834, 0.6931472
    %v1836 = vsub.f32 %v1780, %v1821
    %v1837 = vsub.f32 %v1781, %v1823
    %v1838 = vsub.f32 %v1782, %v1825
    %v1839 = vsub.f32 %v1783, %v1827
    %v1840 = vsub.f32 %v1784, %v1829
    %v1841 = vsub.f32 %v1785, %v1831
    %v1842 = vsub.f32 %v1786, %v1833
    %v1843 = vsub.f32 %v1787, %v1835
    %1844 = vst [vmem:[#allocation7] sm:$0xff] %v1836
    %1845 = vst [vmem:[#allocation7 + $0x8] sm:$0xff] %v1837
    %1846 = vst [vmem:[#allocation7 + $0x10] sm:$0xff] %v1838
    %1847 = vst [vmem:[#allocation7 + $0x18] sm:$0xff] %v1839
    %1848 = vst [vmem:[#allocation7 + $0x20] sm:$0xff] %v1840
    %1849 = vst [vmem:[#allocation7 + $0x28] sm:$0xff] %v1841
    %1850 = vst [vmem:[#allocation7 + $0x30] sm:$0xff] %v1842
    %1851 = vst [vmem:[#allocation7 + $0x38] sm:$0xff] %v1843
    // Predicated region
    $region42: #{tpu_custom_call.1} parent=1 // pred_check
      _
    $region43: #{tpu_custom_call.1} parent=1 // pred_check_branch
      %1853 = sbr.rel (0) target = $region45
    $region44: #{tpu_custom_call.1} parent=1 // pred_region
      %1855 = vsyncadd [#allocation4], 0
      %s1856 = sshll.u32 [#allocation7], 4
      %s1857 = int_to_ptr.vmem [resolvable:$true] %s1856
      %s1858 = sshll.u32 %s8, 4
      %s1859 = int_to_ptr.hbm [resolvable:$true] %s1858
      %1864 = dma.vmem_to_hbm [thread:$0]  %s1857, 1024, %s1859, [#allocation4], 128, 128, 8
    $region45: #{tpu_custom_call.1} parent=1 // pred_fallthru
      _
    // Predicated region
    $region46: #{tpu_custom_call.1} parent=1 // pred_check
      _
    $region47: #{tpu_custom_call.1} parent=1 // pred_check_branch
      %1866 = sbr.rel (0) target = $region49
    $region48: #{tpu_custom_call.1} parent=1 // pred_region
      %1868 = dma.done [#allocation4], 1024
    $region49: #{tpu_custom_call.1} parent=1 // pred_fallthru
      _
    %1869 = vsyncpa [#allocation3], 1
    %1870 = vsyncpa [#allocation6], 1
    %1871 = vsyncpa [#allocation4], 1

</llo_original>
